<compile_context>
chip_gen: v6e
topology: v6e:2x2x1
jax: 0.10.0
libtpu: 0.0.40
codegen_flags: <defaults>
</compile_context>

<pallas_src>
import functools

import jax
import jax.numpy as jnp
from jax import lax
from jax.experimental import pallas as pl
from jax.experimental.pallas import tpu as pltpu


# ---------------------------------------------------------------------------
# Pallas kernel: grid over time blocks, inner loop over T steps, ht resident
# in VMEM scratch [B*C, H] across the whole sequence.
# ---------------------------------------------------------------------------
def _make_gkt_kernel(B, C, H, E, T):
    BC = B * C
    BF = jnp.bfloat16

    def kernel(xe_ref,                       # (T, B, E)  response embedding x_t
               row_ref,                      # (T, BC, 3) {adj, is_self_row, valid_row}
               bvec_ref,                     # (T, B, 4)  {self_row, next_row, valid, qn_valid}
               w_hx_ref, b_hx_ref,           # fused f_self fc1 + neighbor-self fc1
               ws2_ref, vec_s2_ref,          # f_self fc2 + [bias; bn_scale; bn_shift]
               w_hp_ref,                     # fused h_prev weights [wn1_h | w_gh(r|z|n)]
               wn1e_ref, wn2_ref, vec_n2_ref,
               w_ea_ref, b_ea_ref, eag_ref,  # EraseAddGate
               w_gi_ref, b_gru_ref,          # GRU input weights + [input; hidden] biases
               rep_ref, ctab_ref,            # [BC,B] one-hot broadcast, [BC,E] concept table
               wp_ref, bp_ref,               # predict head row [1,H], bias [1,1]
               pred_ref,                     # out (T, B, 1)
               ht_ref):                      # scratch VMEM [BC, H]

        @pl.when(pl.program_id(0) == 0)
        def _init():
            ht_ref[...] = jnp.zeros_like(ht_ref)

        def mm(a, w_ref):
            return jnp.dot(a.astype(BF), w_ref[...],
                           preferred_element_type=jnp.float32)

        # hoisted: loop-invariant row iota for the one-hot gathers
        iota_bc = lax.broadcasted_iota(jnp.int32, (B, BC), 1)

        @pl.loop(0, T)
        def _step(t):
            xe = xe_ref[t]                                   # [B, E]  f32
            row = row_ref[t]                                 # [BC, 3]
            bv = bvec_ref[t]                                 # [B, 4]
            adj = row[:, 0:1]
            self_m = row[:, 1:2]
            valid_r = row[:, 2:3]
            self_idx = bv[:, 0:1].astype(jnp.int32)          # [B, 1]
            next_idx = bv[:, 1:2].astype(jnp.int32)
            valid_b = bv[:, 2:3]
            qn_valid = bv[:, 3:4]

            h_prev = ht_ref[...]                             # [BC, H] f32
            h_prev_bf = h_prev.astype(BF)

            # gather previous hidden state of the answered concept (one-hot matmul)
            oh_self = (iota_bc == self_idx).astype(BF)       # [B, BC]
            h_self = jnp.dot(oh_self, h_prev_bf,
                             preferred_element_type=jnp.float32)        # [B, H]

            # fused f_self fc1 | neighbor fc1 self-part : [h_self|xe] @ [H+E, 2H]
            hx = jnp.concatenate([h_self, xe], axis=1)       # [B, H+E]
            sf = mm(hx, w_hx_ref) + b_hx_ref[...]            # [B, 2H]
            t1 = jnp.maximum(sf[:, :H], 0.0)
            self_c1 = sf[:, H:]

            # f_self fc2 + eval BatchNorm (folded)
            t2 = jnp.maximum(mm(t1, ws2_ref) + vec_s2_ref[0:1, :], 0.0)
            self_feat = t2 * vec_s2_ref[1:2, :] + vec_s2_ref[2:3, :]    # [B, H]

            # broadcast per-student rows to per-(student,concept) rows: one matmul
            pack = jnp.concatenate([self_c1, self_feat, xe], axis=1)    # [B, 2H+E]
            big = jnp.dot(rep_ref[...], pack.astype(BF),
                          preferred_element_type=jnp.float32)           # [BC, 2H+E]
            c1_bc = big[:, :H]
            sfeat_bc = big[:, H:2 * H]
            res_bc = big[:, 2 * H:]

            # in-kernel _aggregate: concept embedding with response override
            ce = jnp.where(self_m > 0.0, res_bc, ctab_ref[...] * valid_r)  # [BC, E]

            # fused h_prev matmuls: neighbor fc1 hidden part | GRU hidden gates
            hp = jnp.dot(h_prev_bf, w_hp_ref[...],
                         preferred_element_type=jnp.float32)             # [BC, 4H]
            pre1 = hp[:, :H] + mm(ce, wn1e_ref)
            gh = hp[:, H:] + b_gru_ref[1:2, :]                           # [BC, 3H]

            # neighbor MLP fc2 + eval BatchNorm, then adjacency weighting
            u = jnp.maximum(pre1 + c1_bc, 0.0)
            u = jnp.maximum(mm(u, wn2_ref) + vec_n2_ref[0:1, :], 0.0)
            u = u * vec_n2_ref[1:2, :] + vec_n2_ref[2:3, :]
            neigh = adj * u                                              # [BC, H]

            # m_next: neighbor features everywhere, self features at row qt
            m_next = jnp.where(self_m > 0.0, sfeat_bc, neigh)

            # EraseAddGate (erase|add fused into one [H,2H] matmul)
            g = mm(m_next, w_ea_ref) + b_ea_ref[...]
            erase = jax.nn.sigmoid(g[:, :H])
            add = jnp.tanh(g[:, H:])
            wk = eag_ref[...]                                            # [BC, 1]
            m2 = m_next - wk * erase * m_next + wk * add

            # GRUCell (r|z|n fused)
            gi = mm(m2, w_gi_ref) + b_gru_ref[0:1, :]
            r = jax.nn.sigmoid(gi[:, :H] + gh[:, :H])
            z = jax.nn.sigmoid(gi[:, H:2 * H] + gh[:, H:2 * H])
            n = jnp.tanh(gi[:, 2 * H:] + r * gh[:, 2 * H:])
            h_gru = (1.0 - z) * n + z * h_prev

            # padded (qt == -1) students keep their previous state
            h_new = jnp.where(valid_r > 0.0, h_gru, h_prev)
            ht_ref[...] = h_new

            # ---- _predict + _get_next_pred (elementwise head, no M=1 dot) ---
            oh_next = (iota_bc == next_idx).astype(BF)
            h_sel = jnp.dot(oh_next, h_new.astype(BF),
                            preferred_element_type=jnp.float32)          # [B, H]
            plin = jnp.sum(h_sel * wp_ref[...], axis=-1, keepdims=True) + bp_ref[...]
            yt = jnp.where(valid_b > 0.0, jax.nn.sigmoid(plin), plin)
            pred_ref[t] = yt * qn_valid                                  # [B, 1]

    return kernel


# ---------------------------------------------------------------------------
# JAX glue: whole-sequence batched gathers / mask construction + one call.
# ---------------------------------------------------------------------------
def gkt_forward(features, questions, params, C, H, E, res_len, tblk=32):
    B, S = features.shape
    HE = H + E
    BC = B * C
    T = int(min(S, tblk))
    nb = -(-S // T)
    Sp = nb * T

    q = questions.astype(jnp.int32)
    f = features.astype(jnp.int32)
    if Sp > S:
        q = jnp.pad(q, ((0, 0), (0, Sp - S)), constant_values=-1)
        f = jnp.pad(f, ((0, 0), (0, Sp - S)), constant_values=0)

    mask = q >= 0
    qc = jnp.where(mask, q, 0)
    q_next = jnp.concatenate([q[:, 1:], jnp.full((B, 1), -1, jnp.int32)], axis=1)
    qn_mask = q_next >= 0
    qnc = jnp.where(qn_mask, q_next, 0)

    # response embedding of the answered (question, response) pair per step
    xt = jnp.clip(f, 0, res_len * C - 1)
    res_emb = params["emb_x"][xt]                                # [B, Sp, E]
    xe_all = jnp.transpose(res_emb, (1, 0, 2))                   # [Sp, B, E]

    # per-(student,concept)-row step data: {adjacency, is-self-row, student-valid}
    adj = params["graph"][qc]                                    # [B, Sp, C]
    cids = lax.broadcasted_iota(jnp.int32, (B, Sp, C), 2)
    self_m = ((cids == qc[:, :, None]) & mask[:, :, None]).astype(jnp.float32)
    valid_r = jnp.broadcast_to(mask[:, :, None], (B, Sp, C)).astype(jnp.float32)
    row_all = jnp.stack([adj, self_m, valid_r], axis=-1)         # [B, Sp, C, 3]
    row_all = jnp.transpose(row_all, (1, 0, 2, 3)).reshape(Sp, BC, 3)

    # per-student step data: {self row idx, next row idx, qt valid, q_next valid}
    offs = (jnp.arange(B, dtype=jnp.int32) * C)[:, None]
    bvec = jnp.stack([(offs + qc).astype(jnp.float32),
                      (offs + qnc).astype(jnp.float32),
                      mask.astype(jnp.float32),
                      qn_mask.astype(jnp.float32)], axis=-1)     # [B, Sp, 4]
    bvec_all = jnp.transpose(bvec, (1, 0, 2))                    # [Sp, B, 4]

    # ---- pack weights once; matmul RHS in bf16, everything else f32 --------
    p = params
    bf = jnp.bfloat16
    ws1, wn1 = p["ws1"], p["wn1"]
    w_hx = jnp.concatenate([ws1, wn1[:HE]], axis=1).astype(bf)            # [H+E, 2H]
    b_hx = jnp.concatenate([p["bs1"], p["bn1"]], axis=1)                  # [1, 2H]
    ws2 = p["ws2"].astype(bf)
    vec_s2 = jnp.concatenate([p["bs2"], p["s_bn_scale"], p["s_bn_shift"]], axis=0)
    w_hp = jnp.concatenate([wn1[HE:HE + H], p["w_hr"], p["w_hz"], p["w_hn"]],
                           axis=1).astype(bf)                             # [H, 4H]
    wn1_e = wn1[HE + H:].astype(bf)                                       # [E, H]
    wn2 = p["wn2"].astype(bf)
    vec_n2 = jnp.concatenate([p["bn2"], p["n_bn_scale"], p["n_bn_shift"]], axis=0)
    w_ea = jnp.concatenate([p["we"], p["wa"]], axis=1).astype(bf)         # [H, 2H]
    b_ea = jnp.concatenate([p["be"], p["ba"]], axis=1)                    # [1, 2H]
    eag = jnp.tile(p["eag_w"], (B, 1))                                    # [BC, 1]
    w_gi = jnp.concatenate([p["w_ir"], p["w_iz"], p["w_in"]], axis=1).astype(bf)
    b_gru = jnp.concatenate(
        [jnp.concatenate([p["b_ir"], p["b_iz"], p["b_in"]], axis=1),
         jnp.concatenate([p["b_hr"], p["b_hz"], p["b_hn"]], axis=1)], axis=0)  # [2, 3H]
    rep = (jnp.arange(BC, dtype=jnp.int32)[:, None] // C
           == jnp.arange(B, dtype=jnp.int32)[None, :]).astype(bf)         # [BC, B]
    ctab = jnp.tile(p["emb_c"][:C], (B, 1))                               # [BC, E]
    wp_row = p["wp"].T                                                    # [1, H]
    bp = p["bp"]                                                          # [1, 1]

    weights = [w_hx, b_hx, ws2, vec_s2, w_hp, wn1_e, wn2, vec_n2,
               w_ea, b_ea, eag, w_gi, b_gru, rep, ctab, wp_row, bp]

    step_map = lambda i: (i, 0, 0)

    def cspec(arr):
        # TODO(synk): pipeline_mode=pl.Buffered(1) would drop the useless second
        # buffer for these never-refetched weights (only matters at large C).
        return pl.BlockSpec(arr.shape, lambda i: (0, 0))

    grid_spec = pltpu.PrefetchScalarGridSpec(
        num_scalar_prefetch=0,
        grid=(nb,),
        in_specs=[pl.BlockSpec((T, B, E), step_map),
                  pl.BlockSpec((T, BC, 3), step_map),
                  pl.BlockSpec((T, B, 4), step_map)]
                 + [cspec(w) for w in weights],
        out_specs=pl.BlockSpec((T, B, 1), step_map),
        scratch_shapes=[pltpu.VMEM((BC, H), jnp.float32)],
    )

    pred_all = pl.pallas_call(
        _make_gkt_kernel(B, C, H, E, T),
        out_shape=jax.ShapeDtypeStruct((Sp, B, 1), jnp.float32),
        grid_spec=grid_spec,
        compiler_params=pltpu.CompilerParams(dimension_semantics=("arbitrary",)),
    )(xe_all, row_all, bvec_all, *weights)

    # row t predicts questions[:, t+1]; final / padded rows are dummies
    return pred_all[:S - 1, :, 0].T                                       # [B, S-1]


# ---------------------------------------------------------------------------
# Deterministic parameter init (shapes from GKT.__init__, graph_type='PAM').
# ---------------------------------------------------------------------------
def init_params(seed, C, H, E, res_len):
    key = jax.random.PRNGKey(seed)
    keys = iter(jax.random.split(key, 64))
    HE = H + E

    def uni(shape, scale):
        return jax.random.uniform(next(keys), shape, jnp.float32, -scale, scale)

    def linear(fin, fout):
        s = 1.0 / float(fin) ** 0.5
        return uni((fin, fout), s), uni((1, fout), s)

    p = {}
    p["graph"] = jax.random.uniform(next(keys), (C, C), jnp.float32)   # PAM graph
    p["emb_x"] = 0.1 * jax.random.normal(next(keys), (res_len * C, E), jnp.float32)
    emb_c = 0.1 * jax.random.normal(next(keys), (C + 1, E), jnp.float32)
    p["emb_c"] = emb_c.at[C].set(0.0)                  # padding_idx -> last row zero

    # f_self : MLP(H+E -> H -> H) + BatchNorm1d(H) (eval running stats)
    p["ws1"], p["bs1"] = linear(HE, H)
    p["ws2"], p["bs2"] = linear(H, H)
    p["s_bn_scale"] = jnp.full((1, H), 1.0 / (1.0 + 1e-5) ** 0.5, jnp.float32)
    p["s_bn_shift"] = jnp.zeros((1, H), jnp.float32)

    # f_neighbor[0] : MLP(2*(H+E) -> H -> H) + BatchNorm1d(H)
    # (f_neighbor[1] exists in the module but is unused on the PAM forward path)
    p["wn1"], p["bn1"] = linear(2 * HE, H)
    p["wn2"], p["bn2"] = linear(H, H)
    p["n_bn_scale"] = jnp.full((1, H), 1.0 / (1.0 + 1e-5) ** 0.5, jnp.float32)
    p["n_bn_shift"] = jnp.zeros((1, H), jnp.float32)

    # EraseAddGate(H, C)
    p["we"], p["be"] = linear(H, H)
    p["wa"], p["ba"] = linear(H, H)
    p["eag_w"] = uni((C, 1), 1.0 / float(C) ** 0.5)

    # GRUCell(H, H), gates split r/z/n; weights stored as [in, out]
    s = 1.0 / float(H) ** 0.5
    for name in ("ir", "iz", "in", "hr", "hz", "hn"):
        p["w_" + name] = uni((H, H), s)
        p["b_" + name] = uni((1, H), s)

    # predict Linear(H, 1)
    p["wp"], p["bp"] = linear(H, 1)
    return p


if __name__ == "__main__":
    # small config: concept_num=16, hidden_dim=32, embedding_dim=32,
    # binary=False -> res_len=12, batch=4, seq_len=8
    C, H, E = 16, 32, 32
    res_len = 12
    B, seq_len = 4, 8

    params = init_params(0, C, H, E, res_len)

    key = jax.random.PRNGKey(0)
    kf, kq, km = jax.random.split(key, 3)
    features = jax.random.randint(kf, (B, seq_len), 0, res_len * C, dtype=jnp.int32)
    questions = jax.random.randint(kq, (B, seq_len), 0, C, dtype=jnp.int32)
    # sprinkle -1 padding to exercise the qt_mask path
    pad = jax.random.bernoulli(km, 0.2, (B, seq_len))
    questions = jnp.where(pad, jnp.int32(-1), questions)

    fwd = jax.jit(functools.partial(gkt_forward, C=C, H=H, E=E, res_len=res_len))
    pred_res = fwd(features, questions, params)
    jax.block_until_ready(pred_res)

    assert pred_res.shape == (B, seq_len - 1)
    assert bool(jnp.all(jnp.isfinite(pred_res)))
    print("KERNEL_OK")
</pallas_src>

<mosaic_0001>
module attributes {stable_mosaic.version = 11 : i64} {
  func.func @kernel(%arg0: i32, %arg1: memref<8x4x32xf32, #tpu.memory_space<vmem>>, %arg2: memref<8x64x3xf32, #tpu.memory_space<vmem>>, %arg3: memref<8x4x4xf32, #tpu.memory_space<vmem>>, %arg4: memref<64x64xbf16, #tpu.memory_space<vmem>>, %arg5: memref<1x64xf32, #tpu.memory_space<vmem>>, %arg6: memref<32x32xbf16, #tpu.memory_space<vmem>>, %arg7: memref<3x32xf32, #tpu.memory_space<vmem>>, %arg8: memref<32x128xbf16, #tpu.memory_space<vmem>>, %arg9: memref<32x32xbf16, #tpu.memory_space<vmem>>, %arg10: memref<32x32xbf16, #tpu.memory_space<vmem>>, %arg11: memref<3x32xf32, #tpu.memory_space<vmem>>, %arg12: memref<32x64xbf16, #tpu.memory_space<vmem>>, %arg13: memref<1x64xf32, #tpu.memory_space<vmem>>, %arg14: memref<64x1xf32, #tpu.memory_space<vmem>>, %arg15: memref<32x96xbf16, #tpu.memory_space<vmem>>, %arg16: memref<2x96xf32, #tpu.memory_space<vmem>>, %arg17: memref<64x4xbf16, #tpu.memory_space<vmem>>, %arg18: memref<64x32xf32, #tpu.memory_space<vmem>>, %arg19: memref<1x32xf32, #tpu.memory_space<vmem>>, %arg20: memref<1x1xf32, #tpu.memory_space<vmem>>, %arg21: memref<8x4x1xf32, #tpu.memory_space<vmem>>, %arg22: memref<64x32xf32, #tpu.memory_space<vmem>>) attributes {dimension_semantics = [#tpu.dimension_semantics<arbitrary>], iteration_bounds = array<i64: 1>, scalar_prefetch = 0 : i64, scratch_operands = 1 : i64, tpu.core_type = #tpu.core_type<tc>, window_params = [{transform_indices = @transform_0, window_bounds = array<i64: 8, 4, 32>}, {transform_indices = @transform_1, window_bounds = array<i64: 8, 64, 3>}, {transform_indices = @transform_2, window_bounds = array<i64: 8, 4, 4>}, {pipeline_mode = #tpu.pipeline_mode<synchronous>, transform_indices = @transform_3, window_bounds = array<i64: 64, 64>}, {pipeline_mode = #tpu.pipeline_mode<synchronous>, transform_indices = @transform_4, window_bounds = array<i64: 1, 64>}, {pipeline_mode = #tpu.pipeline_mode<synchronous>, transform_indices = @transform_5, window_bounds = array<i64: 32, 32>}, {pipeline_mode = #tpu.pipeline_mode<synchronous>, transform_indices = @transform_6, window_bounds = array<i64: 3, 32>}, {pipeline_mode = #tpu.pipeline_mode<synchronous>, transform_indices = @transform_7, window_bounds = array<i64: 32, 128>}, {pipeline_mode = #tpu.pipeline_mode<synchronous>, transform_indices = @transform_8, window_bounds = array<i64: 32, 32>}, {pipeline_mode = #tpu.pipeline_mode<synchronous>, transform_indices = @transform_9, window_bounds = array<i64: 32, 32>}, {pipeline_mode = #tpu.pipeline_mode<synchronous>, transform_indices = @transform_10, window_bounds = array<i64: 3, 32>}, {pipeline_mode = #tpu.pipeline_mode<synchronous>, transform_indices = @transform_11, window_bounds = array<i64: 32, 64>}, {pipeline_mode = #tpu.pipeline_mode<synchronous>, transform_indices = @transform_12, window_bounds = array<i64: 1, 64>}, {pipeline_mode = #tpu.pipeline_mode<synchronous>, transform_indices = @transform_13, window_bounds = array<i64: 64, 1>}, {pipeline_mode = #tpu.pipeline_mode<synchronous>, transform_indices = @transform_14, window_bounds = array<i64: 32, 96>}, {pipeline_mode = #tpu.pipeline_mode<synchronous>, transform_indices = @transform_15, window_bounds = array<i64: 2, 96>}, {pipeline_mode = #tpu.pipeline_mode<synchronous>, transform_indices = @transform_16, window_bounds = array<i64: 64, 4>}, {pipeline_mode = #tpu.pipeline_mode<synchronous>, transform_indices = @transform_17, window_bounds = array<i64: 64, 32>}, {pipeline_mode = #tpu.pipeline_mode<synchronous>, transform_indices = @transform_18, window_bounds = array<i64: 1, 32>}, {pipeline_mode = #tpu.pipeline_mode<synchronous>, transform_indices = @transform_19, window_bounds = array<i64: 1, 1>}, {transform_indices = @transform_20, window_bounds = array<i64: 8, 4, 1>}]} {
    %c0_i32 = arith.constant 0 : i32
    %0 = arith.cmpi eq, %arg0, %c0_i32 : i32
    %1 = arith.extui %0 : i1 to i32
    %c0_i32_0 = arith.constant 0 : i32
    %2 = arith.cmpi ne, %1, %c0_i32_0 : i32
    scf.if %2 {
      %cst = arith.constant 0.000000e+00 : f32
      %5 = vector.broadcast %cst : f32 to vector<64x32xf32>
      %c0 = arith.constant 0 : index
      %c0_3 = arith.constant 0 : index
      %6 = vector.load %arg22[%c0, %c0_3] : memref<64x32xf32, #tpu.memory_space<vmem>>, vector<64x32xf32>
      tpu.vector_store %arg22[%c0, %c0_3], %5 {strides = array<i32>} : memref<64x32xf32, #tpu.memory_space<vmem>>, vector<64x32xf32>,
    } else {
    }
    %3 = tpu.iota {dimensions = array<i32: 1>} : vector<4x64xi32>
    %c0_i32_1 = arith.constant 0 : i32
    %c8_i32 = arith.constant 8 : i32
    %4 = arith.addi %c0_i32_1, %c8_i32 : i32
    %c1_i32 = arith.constant 1 : i32
    scf.for %arg23 = %c0_i32_1 to %4 step %c1_i32  : i32 {
      %c1_i32_3 = arith.constant 1 : i32
      %5 = arith.muli %arg23, %c1_i32_3 : i32
      %c0_i32_4 = arith.constant 0 : i32
      %6 = arith.addi %c0_i32_4, %5 : i32
      %7 = arith.index_cast %6 : i32 to index
      %c0 = arith.constant 0 : index
      %c0_5 = arith.constant 0 : index
      %8 = vector.load %arg1[%7, %c0, %c0_5] : memref<8x4x32xf32, #tpu.memory_space<vmem>>, vector<1x4x32xf32>
      %9 = vector.shape_cast %8 : vector<1x4x32xf32> to vector<4x32xf32>
      %10 = arith.index_cast %6 : i32 to index
      %c0_6 = arith.constant 0 : index
      %c0_7 = arith.constant 0 : index
      %11 = vector.load %arg2[%10, %c0_6, %c0_7] : memref<8x64x3xf32, #tpu.memory_space<vmem>>, vector<1x64x3xf32>
      %12 = vector.shape_cast %11 : vector<1x64x3xf32> to vector<64x3xf32>
      %13 = arith.index_cast %6 : i32 to index
      %c0_8 = arith.constant 0 : index
      %c0_9 = arith.constant 0 : index
      %14 = vector.load %arg3[%13, %c0_8, %c0_9] : memref<8x4x4xf32, #tpu.memory_space<vmem>>, vector<1x4x4xf32>
      %15 = vector.shape_cast %14 : vector<1x4x4xf32> to vector<4x4xf32>
      %16 = vector.extract_strided_slice %12 {offsets = [0, 0], sizes = [64, 1], strides = [1, 1]} : vector<64x3xf32> to vector<64x1xf32>
      %17 = vector.extract_strided_slice %12 {offsets = [0, 1], sizes = [64, 1], strides = [1, 1]} : vector<64x3xf32> to vector<64x1xf32>
      %18 = vector.extract_strided_slice %12 {offsets = [0, 2], sizes = [64, 1], strides = [1, 1]} : vector<64x3xf32> to vector<64x1xf32>
      %19 = vector.extract_strided_slice %15 {offsets = [0, 0], sizes = [4, 1], strides = [1, 1]} : vector<4x4xf32> to vector<4x1xf32>
      %20 = arith.fptosi %19 : vector<4x1xf32> to vector<4x1xi32>
      %21 = vector.extract_strided_slice %15 {offsets = [0, 1], sizes = [4, 1], strides = [1, 1]} : vector<4x4xf32> to vector<4x1xf32>
      %22 = arith.fptosi %21 : vector<4x1xf32> to vector<4x1xi32>
      %23 = vector.extract_strided_slice %15 {offsets = [0, 2], sizes = [4, 1], strides = [1, 1]} : vector<4x4xf32> to vector<4x1xf32>
      %24 = vector.extract_strided_slice %15 {offsets = [0, 3], sizes = [4, 1], strides = [1, 1]} : vector<4x4xf32> to vector<4x1xf32>
      %c0_10 = arith.constant 0 : index
      %c0_11 = arith.constant 0 : index
      %25 = vector.load %arg22[%c0_10, %c0_11] : memref<64x32xf32, #tpu.memory_space<vmem>>, vector<64x32xf32>
      %26 = arith.truncf %25 : vector<64x32xf32> to vector<64x32xbf16>
      %27 = vector.broadcast %20 : vector<4x1xi32> to vector<4x64xi32>
      %28 = arith.cmpi eq, %3, %27 : vector<4x64xi32>
      %29 = arith.extui %28 : vector<4x64xi1> to vector<4x64xi32>
      %30 = arith.sitofp %29 : vector<4x64xi32> to vector<4x64xf32>
      %31 = arith.truncf %30 : vector<4x64xf32> to vector<4x64xbf16>
      %cst = arith.constant dense<0.000000e+00> : vector<4x32xf32>
      %32 = tpu.matmul %31, %26, %cst {dimension_numbers = #tpu.dot_dimension_numbers<[1], [0], [0], [1], [0, 0, 1, 1], [], []>} : vector<4x64xbf16>, vector<64x32xbf16>, vector<4x32xf32> -> vector<4x32xf32>
      %33 = tpu.concatenate %32, %9 in 1 : vector<4x32xf32>, vector<4x32xf32> -> vector<4x64xf32>
      %34 = arith.truncf %33 : vector<4x64xf32> to vector<4x64xbf16>
      %c0_12 = arith.constant 0 : index
      %c0_13 = arith.constant 0 : index
      %35 = vector.load %arg4[%c0_12, %c0_13] : memref<64x64xbf16, #tpu.memory_space<vmem>>, vector<64x64xbf16>
      %cst_14 = arith.constant dense<0.000000e+00> : vector<4x64xf32>
      %36 = tpu.matmul %34, %35, %cst_14 {dimension_numbers = #tpu.dot_dimension_numbers<[1], [0], [0], [1], [0, 0, 1, 1], [], []>} : vector<4x64xbf16>, vector<64x64xbf16>, vector<4x64xf32> -> vector<4x64xf32>
      %c0_15 = arith.constant 0 : index
      %c0_16 = arith.constant 0 : index
      %37 = vector.load %arg5[%c0_15, %c0_16] : memref<1x64xf32, #tpu.memory_space<vmem>>, vector<1x64xf32>
      %38 = vector.broadcast %37 : vector<1x64xf32> to vector<4x64xf32>
      %39 = arith.addf %36, %38 : vector<4x64xf32>
      %40 = vector.extract_strided_slice %39 {offsets = [0, 0], sizes = [4, 32], strides = [1, 1]} : vector<4x64xf32> to vector<4x32xf32>
      %cst_17 = arith.constant 0.000000e+00 : f32
      %41 = vector.broadcast %cst_17 : f32 to vector<4x32xf32>
      %42 = arith.maximumf %40, %41 : vector<4x32xf32>
      %43 = vector.extract_strided_slice %39 {offsets = [0, 32], sizes = [4, 32], strides = [1, 1]} : vector<4x64xf32> to vector<4x32xf32>
      %44 = arith.truncf %42 : vector<4x32xf32> to vector<4x32xbf16>
      %c0_18 = arith.constant 0 : index
      %c0_19 = arith.constant 0 : index
      %45 = vector.load %arg6[%c0_18, %c0_19] : memref<32x32xbf16, #tpu.memory_space<vmem>>, vector<32x32xbf16>
      %cst_20 = arith.constant dense<0.000000e+00> : vector<4x32xf32>
      %46 = tpu.matmul %44, %45, %cst_20 {dimension_numbers = #tpu.dot_dimension_numbers<[1], [0], [0], [1], [0, 0, 1, 1], [], []>} : vector<4x32xbf16>, vector<32x32xbf16>, vector<4x32xf32> -> vector<4x32xf32>
      %c0_21 = arith.constant 0 : index
      %c0_22 = arith.constant 0 : index
      %47 = vector.load %arg7[%c0_21, %c0_22] : memref<3x32xf32, #tpu.memory_space<vmem>>, vector<1x32xf32>
      %48 = vector.broadcast %47 : vector<1x32xf32> to vector<4x32xf32>
      %49 = arith.addf %46, %48 : vector<4x32xf32>
      %cst_23 = arith.constant 0.000000e+00 : f32
      %50 = vector.broadcast %cst_23 : f32 to vector<4x32xf32>
      %51 = arith.maximumf %49, %50 : vector<4x32xf32>
      %c1 = arith.constant 1 : index
      %c0_24 = arith.constant 0 : index
      %52 = vector.load %arg7[%c1, %c0_24] : memref<3x32xf32, #tpu.memory_space<vmem>>, vector<1x32xf32>
      %53 = vector.broadcast %52 : vector<1x32xf32> to vector<4x32xf32>
      %54 = arith.mulf %51, %53 : vector<4x32xf32>
      %c2 = arith.constant 2 : index
      %c0_25 = arith.constant 0 : index
      %55 = vector.load %arg7[%c2, %c0_25] : memref<3x32xf32, #tpu.memory_space<vmem>>, vector<1x32xf32>
      %56 = vector.broadcast %55 : vector<1x32xf32> to vector<4x32xf32>
      %57 = arith.addf %54, %56 : vector<4x32xf32>
      %58 = tpu.concatenate %43, %57, %9 in 1 : vector<4x32xf32>, vector<4x32xf32>, vector<4x32xf32> -> vector<4x96xf32>
      %c0_26 = arith.constant 0 : index
      %c0_27 = arith.constant 0 : index
      %59 = vector.load %arg17[%c0_26, %c0_27] : memref<64x4xbf16, #tpu.memory_space<vmem>>, vector<64x4xbf16>
      %60 = arith.truncf %58 : vector<4x96xf32> to vector<4x96xbf16>
      %cst_28 = arith.constant dense<0.000000e+00> : vector<64x96xf32>
      %61 = tpu.matmul %59, %60, %cst_28 {dimension_numbers = #tpu.dot_dimension_numbers<[1], [0], [0], [1], [0, 0, 1, 1], [], []>} : vector<64x4xbf16>, vector<4x96xbf16>, vector<64x96xf32> -> vector<64x96xf32>
      %62 = vector.extract_strided_slice %61 {offsets = [0, 0], sizes = [64, 32], strides = [1, 1]} : vector<64x96xf32> to vector<64x32xf32>
      %63 = vector.extract_strided_slice %61 {offsets = [0, 32], sizes = [64, 32], strides = [1, 1]} : vector<64x96xf32> to vector<64x32xf32>
      %64 = vector.extract_strided_slice %61 {offsets = [0, 64], sizes = [64, 32], strides = [1, 1]} : vector<64x96xf32> to vector<64x32xf32>
      %cst_29 = arith.constant 0.000000e+00 : f32
      %65 = vector.broadcast %cst_29 : f32 to vector<64x1xf32>
      %66 = arith.cmpf ogt, %17, %65 : vector<64x1xf32>
      %c0_30 = arith.constant 0 : index
      %c0_31 = arith.constant 0 : index
      %67 = vector.load %arg18[%c0_30, %c0_31] : memref<64x32xf32, #tpu.memory_space<vmem>>, vector<64x32xf32>
      %68 = vector.broadcast %18 : vector<64x1xf32> to vector<64x32xf32>
      %69 = arith.mulf %67, %68 : vector<64x32xf32>
      %70 = vector.shape_cast %66 : vector<64x1xi1> to vector<64x1xi1>
      %71 = vector.broadcast %70 : vector<64x1xi1> to vector<64x32xi1>
      %72 = arith.select %71, %64, %69 : vector<64x32xi1>, vector<64x32xf32>
      %c0_32 = arith.constant 0 : index
      %c0_33 = arith.constant 0 : index
      %73 = vector.load %arg8[%c0_32, %c0_33] : memref<32x128xbf16, #tpu.memory_space<vmem>>, vector<32x128xbf16>
      %cst_34 = arith.constant dense<0.000000e+00> : vector<64x128xf32>
      %74 = tpu.matmul %26, %73, %cst_34 {dimension_numbers = #tpu.dot_dimension_numbers<[1], [0], [0], [1], [0, 0, 1, 1], [], []>} : vector<64x32xbf16>, vector<32x128xbf16>, vector<64x128xf32> -> vector<64x128xf32>
      %75 = vector.extract_strided_slice %74 {offsets = [0, 0], sizes = [64, 32], strides = [1, 1]} : vector<64x128xf32> to vector<64x32xf32>
      %76 = arith.truncf %72 : vector<64x32xf32> to vector<64x32xbf16>
      %c0_35 = arith.constant 0 : index
      %c0_36 = arith.constant 0 : index
      %77 = vector.load %arg9[%c0_35, %c0_36] : memref<32x32xbf16, #tpu.memory_space<vmem>>, vector<32x32xbf16>
      %cst_37 = arith.constant dense<0.000000e+00> : vector<64x32xf32>
      %78 = tpu.matmul %76, %77, %cst_37 {dimension_numbers = #tpu.dot_dimension_numbers<[1], [0], [0], [1], [0, 0, 1, 1], [], []>} : vector<64x32xbf16>, vector<32x32xbf16>, vector<64x32xf32> -> vector<64x32xf32>
      %79 = arith.addf %75, %78 : vector<64x32xf32>
      %80 = vector.extract_strided_slice %74 {offsets = [0, 32], sizes = [64, 96], strides = [1, 1]} : vector<64x128xf32> to vector<64x96xf32>
      %c1_38 = arith.constant 1 : index
      %c0_39 = arith.constant 0 : index
      %81 = vector.load %arg16[%c1_38, %c0_39] : memref<2x96xf32, #tpu.memory_space<vmem>>, vector<1x96xf32>
      %82 = vector.broadcast %81 : vector<1x96xf32> to vector<64x96xf32>
      %83 = arith.addf %80, %82 : vector<64x96xf32>
      %84 = arith.addf %79, %62 : vector<64x32xf32>
      %cst_40 = arith.constant 0.000000e+00 : f32
      %85 = vector.broadcast %cst_40 : f32 to vector<64x32xf32>
      %86 = arith.maximumf %84, %85 : vector<64x32xf32>
      %87 = arith.truncf %86 : vector<64x32xf32> to vector<64x32xbf16>
      %c0_41 = arith.constant 0 : index
      %c0_42 = arith.constant 0 : index
      %88 = vector.load %arg10[%c0_41, %c0_42] : memref<32x32xbf16, #tpu.memory_space<vmem>>, vector<32x32xbf16>
      %cst_43 = arith.constant dense<0.000000e+00> : vector<64x32xf32>
      %89 = tpu.matmul %87, %88, %cst_43 {dimension_numbers = #tpu.dot_dimension_numbers<[1], [0], [0], [1], [0, 0, 1, 1], [], []>} : vector<64x32xbf16>, vector<32x32xbf16>, vector<64x32xf32> -> vector<64x32xf32>
      %c0_44 = arith.constant 0 : index
      %c0_45 = arith.constant 0 : index
      %90 = vector.load %arg11[%c0_44, %c0_45] : memref<3x32xf32, #tpu.memory_space<vmem>>, vector<1x32xf32>
      %91 = vector.broadcast %90 : vector<1x32xf32> to vector<64x32xf32>
      %92 = arith.addf %89, %91 : vector<64x32xf32>
      %cst_46 = arith.constant 0.000000e+00 : f32
      %93 = vector.broadcast %cst_46 : f32 to vector<64x32xf32>
      %94 = arith.maximumf %92, %93 : vector<64x32xf32>
      %c1_47 = arith.constant 1 : index
      %c0_48 = arith.constant 0 : index
      %95 = vector.load %arg11[%c1_47, %c0_48] : memref<3x32xf32, #tpu.memory_space<vmem>>, vector<1x32xf32>
      %96 = vector.broadcast %95 : vector<1x32xf32> to vector<64x32xf32>
      %97 = arith.mulf %94, %96 : vector<64x32xf32>
      %c2_49 = arith.constant 2 : index
      %c0_50 = arith.constant 0 : index
      %98 = vector.load %arg11[%c2_49, %c0_50] : memref<3x32xf32, #tpu.memory_space<vmem>>, vector<1x32xf32>
      %99 = vector.broadcast %98 : vector<1x32xf32> to vector<64x32xf32>
      %100 = arith.addf %97, %99 : vector<64x32xf32>
      %101 = vector.broadcast %16 : vector<64x1xf32> to vector<64x32xf32>
      %102 = arith.mulf %101, %100 : vector<64x32xf32>
      %cst_51 = arith.constant 0.000000e+00 : f32
      %103 = vector.broadcast %cst_51 : f32 to vector<64x1xf32>
      %104 = arith.cmpf ogt, %17, %103 : vector<64x1xf32>
      %105 = vector.shape_cast %104 : vector<64x1xi1> to vector<64x1xi1>
      %106 = vector.broadcast %105 : vector<64x1xi1> to vector<64x32xi1>
      %107 = arith.select %106, %63, %102 : vector<64x32xi1>, vector<64x32xf32>
      %108 = arith.truncf %107 : vector<64x32xf32> to vector<64x32xbf16>
      %c0_52 = arith.constant 0 : index
      %c0_53 = arith.constant 0 : index
      %109 = vector.load %arg12[%c0_52, %c0_53] : memref<32x64xbf16, #tpu.memory_space<vmem>>, vector<32x64xbf16>
      %cst_54 = arith.constant dense<0.000000e+00> : vector<64x64xf32>
      %110 = tpu.matmul %108, %109, %cst_54 {dimension_numbers = #tpu.dot_dimension_numbers<[1], [0], [0], [1], [0, 0, 1, 1], [], []>} : vector<64x32xbf16>, vector<32x64xbf16>, vector<64x64xf32> -> vector<64x64xf32>
      %c0_55 = arith.constant 0 : index
      %c0_56 = arith.constant 0 : index
      %111 = vector.load %arg13[%c0_55, %c0_56] : memref<1x64xf32, #tpu.memory_space<vmem>>, vector<1x64xf32>
      %112 = vector.broadcast %111 : vector<1x64xf32> to vector<64x64xf32>
      %113 = arith.addf %110, %112 : vector<64x64xf32>
      %114 = vector.extract_strided_slice %113 {offsets = [0, 0], sizes = [64, 32], strides = [1, 1]} : vector<64x64xf32> to vector<64x32xf32>
      %115 = arith.negf %114 : vector<64x32xf32>
      %116 = math.exp %115 : vector<64x32xf32>
      %cst_57 = arith.constant 1.000000e+00 : f32
      %117 = vector.broadcast %cst_57 : f32 to vector<64x32xf32>
      %118 = arith.addf %117, %116 : vector<64x32xf32>
      %119 = arith.divf %117, %118 : vector<64x32xf32>
      %120 = vector.extract_strided_slice %113 {offsets = [0, 32], sizes = [64, 32], strides = [1, 1]} : vector<64x64xf32> to vector<64x32xf32>
      %121 = math.tanh %120 : vector<64x32xf32>
      %c0_58 = arith.constant 0 : index
      %c0_59 = arith.constant 0 : index
      %122 = vector.load %arg14[%c0_58, %c0_59] : memref<64x1xf32, #tpu.memory_space<vmem>>, vector<64x1xf32>
      %123 = vector.broadcast %122 : vector<64x1xf32> to vector<64x32xf32>
      %124 = arith.mulf %123, %119 : vector<64x32xf32>
      %125 = arith.mulf %124, %107 : vector<64x32xf32>
      %126 = arith.subf %107, %125 : vector<64x32xf32>
      %127 = vector.broadcast %122 : vector<64x1xf32> to vector<64x32xf32>
      %128 = arith.mulf %127, %121 : vector<64x32xf32>
      %129 = arith.addf %126, %128 : vector<64x32xf32>
      %130 = arith.truncf %129 : vector<64x32xf32> to vector<64x32xbf16>
      %c0_60 = arith.constant 0 : index
      %c0_61 = arith.constant 0 : index
      %131 = vector.load %arg15[%c0_60, %c0_61] : memref<32x96xbf16, #tpu.memory_space<vmem>>, vector<32x96xbf16>
      %cst_62 = arith.constant dense<0.000000e+00> : vector<64x96xf32>
      %132 = tpu.matmul %130, %131, %cst_62 {dimension_numbers = #tpu.dot_dimension_numbers<[1], [0], [0], [1], [0, 0, 1, 1], [], []>} : vector<64x32xbf16>, vector<32x96xbf16>, vector<64x96xf32> -> vector<64x96xf32>
      %c0_63 = arith.constant 0 : index
      %c0_64 = arith.constant 0 : index
      %133 = vector.load %arg16[%c0_63, %c0_64] : memref<2x96xf32, #tpu.memory_space<vmem>>, vector<1x96xf32>
      %134 = vector.broadcast %133 : vector<1x96xf32> to vector<64x96xf32>
      %135 = arith.addf %132, %134 : vector<64x96xf32>
      %136 = vector.extract_strided_slice %135 {offsets = [0, 0], sizes = [64, 32], strides = [1, 1]} : vector<64x96xf32> to vector<64x32xf32>
      %137 = vector.extract_strided_slice %83 {offsets = [0, 0], sizes = [64, 32], strides = [1, 1]} : vector<64x96xf32> to vector<64x32xf32>
      %138 = arith.addf %136, %137 : vector<64x32xf32>
      %139 = arith.negf %138 : vector<64x32xf32>
      %140 = math.exp %139 : vector<64x32xf32>
      %cst_65 = arith.constant 1.000000e+00 : f32
      %141 = vector.broadcast %cst_65 : f32 to vector<64x32xf32>
      %142 = arith.addf %141, %140 : vector<64x32xf32>
      %143 = arith.divf %141, %142 : vector<64x32xf32>
      %144 = vector.extract_strided_slice %135 {offsets = [0, 32], sizes = [64, 32], strides = [1, 1]} : vector<64x96xf32> to vector<64x32xf32>
      %145 = vector.extract_strided_slice %83 {offsets = [0, 32], sizes = [64, 32], strides = [1, 1]} : vector<64x96xf32> to vector<64x32xf32>
      %146 = arith.addf %144, %145 : vector<64x32xf32>
      %147 = arith.negf %146 : vector<64x32xf32>
      %148 = math.exp %147 : vector<64x32xf32>
      %cst_66 = arith.constant 1.000000e+00 : f32
      %149 = vector.broadcast %cst_66 : f32 to vector<64x32xf32>
      %150 = arith.addf %149, %148 : vector<64x32xf32>
      %151 = arith.divf %149, %150 : vector<64x32xf32>
      %152 = vector.extract_strided_slice %135 {offsets = [0, 64], sizes = [64, 32], strides = [1, 1]} : vector<64x96xf32> to vector<64x32xf32>
      %153 = vector.extract_strided_slice %83 {offsets = [0, 64], sizes = [64, 32], strides = [1, 1]} : vector<64x96xf32> to vector<64x32xf32>
      %154 = arith.mulf %143, %153 : vector<64x32xf32>
      %155 = arith.addf %152, %154 : vector<64x32xf32>
      %156 = math.tanh %155 : vector<64x32xf32>
      %cst_67 = arith.constant 1.000000e+00 : f32
      %157 = vector.broadcast %cst_67 : f32 to vector<64x32xf32>
      %158 = arith.subf %157, %151 : vector<64x32xf32>
      %159 = arith.mulf %158, %156 : vector<64x32xf32>
      %160 = arith.mulf %151, %25 : vector<64x32xf32>
      %161 = arith.addf %159, %160 : vector<64x32xf32>
      %cst_68 = arith.constant 0.000000e+00 : f32
      %162 = vector.broadcast %cst_68 : f32 to vector<64x1xf32>
      %163 = arith.cmpf ogt, %18, %162 : vector<64x1xf32>
      %164 = vector.shape_cast %163 : vector<64x1xi1> to vector<64x1xi1>
      %165 = vector.broadcast %164 : vector<64x1xi1> to vector<64x32xi1>
      %166 = arith.select %165, %161, %25 : vector<64x32xi1>, vector<64x32xf32>
      %c0_69 = arith.constant 0 : index
      %c0_70 = arith.constant 0 : index
      %167 = vector.load %arg22[%c0_69, %c0_70] : memref<64x32xf32, #tpu.memory_space<vmem>>, vector<64x32xf32>
      tpu.vector_store %arg22[%c0_69, %c0_70], %166 {strides = array<i32>} : memref<64x32xf32, #tpu.memory_space<vmem>>, vector<64x32xf32>,
      %168 = vector.broadcast %22 : vector<4x1xi32> to vector<4x64xi32>
      %169 = arith.cmpi eq, %3, %168 : vector<4x64xi32>
      %170 = arith.extui %169 : vector<4x64xi1> to vector<4x64xi32>
      %171 = arith.sitofp %170 : vector<4x64xi32> to vector<4x64xf32>
      %172 = arith.truncf %171 : vector<4x64xf32> to vector<4x64xbf16>
      %173 = arith.truncf %166 : vector<64x32xf32> to vector<64x32xbf16>
      %cst_71 = arith.constant dense<0.000000e+00> : vector<4x32xf32>
      %174 = tpu.matmul %172, %173, %cst_71 {dimension_numbers = #tpu.dot_dimension_numbers<[1], [0], [0], [1], [0, 0, 1, 1], [], []>} : vector<4x64xbf16>, vector<64x32xbf16>, vector<4x32xf32> -> vector<4x32xf32>
      %c0_72 = arith.constant 0 : index
      %c0_73 = arith.constant 0 : index
      %175 = vector.load %arg19[%c0_72, %c0_73] : memref<1x32xf32, #tpu.memory_space<vmem>>, vector<1x32xf32>
      %176 = vector.broadcast %175 : vector<1x32xf32> to vector<4x32xf32>
      %177 = arith.mulf %174, %176 : vector<4x32xf32>
      %cst_74 = arith.constant dense<0.000000e+00> : vector<4xf32>
      %178 = vector.multi_reduction <add>, %177, %cst_74 [1] : vector<4x32xf32> to vector<4xf32>
      %179 = vector.shape_cast %178 : vector<4xf32> to vector<4x1xf32>
      %c0_75 = arith.constant 0 : index
      %c0_76 = arith.constant 0 : index
      %180 = vector.load %arg20[%c0_75, %c0_76] : memref<1x1xf32, #tpu.memory_space<vmem>>, vector<1x1xf32>
      %181 = vector.broadcast %180 : vector<1x1xf32> to vector<4x1xf32>
      %182 = arith.addf %179, %181 : vector<4x1xf32>
      %cst_77 = arith.constant 0.000000e+00 : f32
      %183 = vector.broadcast %cst_77 : f32 to vector<4x1xf32>
      %184 = arith.cmpf ogt, %23, %183 : vector<4x1xf32>
      %185 = arith.negf %182 : vector<4x1xf32>
      %186 = math.exp %185 : vector<4x1xf32>
      %cst_78 = arith.constant 1.000000e+00 : f32
      %187 = vector.broadcast %cst_78 : f32 to vector<4x1xf32>
      %188 = arith.addf %187, %186 : vector<4x1xf32>
      %189 = arith.divf %187, %188 : vector<4x1xf32>
      %190 = arith.select %184, %189, %182 : vector<4x1xi1>, vector<4x1xf32>
      %191 = arith.mulf %190, %24 : vector<4x1xf32>
      %192 = arith.index_cast %6 : i32 to index
      %c0_79 = arith.constant 0 : index
      %c0_80 = arith.constant 0 : index
      %193 = vector.load %arg21[%192, %c0_79, %c0_80] : memref<8x4x1xf32, #tpu.memory_space<vmem>>, vector<1x4x1xf32>
      %194 = vector.shape_cast %193 : vector<1x4x1xf32> to vector<4x1xf32>
      %195 = vector.shape_cast %191 : vector<4x1xf32> to vector<1x4x1xf32>
      tpu.vector_store %arg21[%192, %c0_79, %c0_80], %195 {strides = array<i32>} : memref<8x4x1xf32, #tpu.memory_space<vmem>>, vector<1x4x1xf32>,
    }
    %c8_i32_2 = arith.constant 8 : i32
    return
  }
  func.func @transform_0(%arg0: i32) -> (i32, i32, i32) {
    %c0_i32 = arith.constant 0 : i32
    %c0_i32_0 = arith.constant 0 : i32
    %c0_i32_1 = arith.constant 0 : i32
    return %arg0, %c0_i32, %c0_i32_0 : i32, i32, i32
  }
  func.func @transform_1(%arg0: i32) -> (i32, i32, i32) {
    %c0_i32 = arith.constant 0 : i32
    %c0_i32_0 = arith.constant 0 : i32
    %c0_i32_1 = arith.constant 0 : i32
    return %arg0, %c0_i32, %c0_i32_0 : i32, i32, i32
  }
  func.func @transform_2(%arg0: i32) -> (i32, i32, i32) {
    %c0_i32 = arith.constant 0 : i32
    %c0_i32_0 = arith.constant 0 : i32
    %c0_i32_1 = arith.constant 0 : i32
    return %arg0, %c0_i32, %c0_i32_0 : i32, i32, i32
  }
  func.func @transform_3(%arg0: i32) -> (i32, i32) {
    %c0_i32 = arith.constant 0 : i32
    %c0_i32_0 = arith.constant 0 : i32
    %c0_i32_1 = arith.constant 0 : i32
    return %c0_i32, %c0_i32_0 : i32, i32
  }
  func.func @transform_4(%arg0: i32) -> (i32, i32) {
    %c0_i32 = arith.constant 0 : i32
    %c0_i32_0 = arith.constant 0 : i32
    %c0_i32_1 = arith.constant 0 : i32
    return %c0_i32, %c0_i32_0 : i32, i32
  }
  func.func @transform_5(%arg0: i32) -> (i32, i32) {
    %c0_i32 = arith.constant 0 : i32
    %c0_i32_0 = arith.constant 0 : i32
    %c0_i32_1 = arith.constant 0 : i32
    return %c0_i32, %c0_i32_0 : i32, i32
  }
  func.func @transform_6(%arg0: i32) -> (i32, i32) {
    %c0_i32 = arith.constant 0 : i32
    %c0_i32_0 = arith.constant 0 : i32
    %c0_i32_1 = arith.constant 0 : i32
    return %c0_i32, %c0_i32_0 : i32, i32
  }
  func.func @transform_7(%arg0: i32) -> (i32, i32) {
    %c0_i32 = arith.constant 0 : i32
    %c0_i32_0 = arith.constant 0 : i32
    %c0_i32_1 = arith.constant 0 : i32
    return %c0_i32, %c0_i32_0 : i32, i32
  }
  func.func @transform_8(%arg0: i32) -> (i32, i32) {
    %c0_i32 = arith.constant 0 : i32
    %c0_i32_0 = arith.constant 0 : i32
    %c0_i32_1 = arith.constant 0 : i32
    return %c0_i32, %c0_i32_0 : i32, i32
  }
  func.func @transform_9(%arg0: i32) -> (i32, i32) {
    %c0_i32 = arith.constant 0 : i32
    %c0_i32_0 = arith.constant 0 : i32
    %c0_i32_1 = arith.constant 0 : i32
    return %c0_i32, %c0_i32_0 : i32, i32
  }
  func.func @transform_10(%arg0: i32) -> (i32, i32) {
    %c0_i32 = arith.constant 0 : i32
    %c0_i32_0 = arith.constant 0 : i32
    %c0_i32_1 = arith.constant 0 : i32
    return %c0_i32, %c0_i32_0 : i32, i32
  }
  func.func @transform_11(%arg0: i32) -> (i32, i32) {
    %c0_i32 = arith.constant 0 : i32
    %c0_i32_0 = arith.constant 0 : i32
    %c0_i32_1 = arith.constant 0 : i32
    return %c0_i32, %c0_i32_0 : i32, i32
  }
  func.func @transform_12(%arg0: i32) -> (i32, i32) {
    %c0_i32 = arith.constant 0 : i32
    %c0_i32_0 = arith.constant 0 : i32
    %c0_i32_1 = arith.constant 0 : i32
    return %c0_i32, %c0_i32_0 : i32, i32
  }
  func.func @transform_13(%arg0: i32) -> (i32, i32) {
    %c0_i32 = arith.constant 0 : i32
    %c0_i32_0 = arith.constant 0 : i32
    %c0_i32_1 = arith.constant 0 : i32
    return %c0_i32, %c0_i32_0 : i32, i32
  }
  func.func @transform_14(%arg0: i32) -> (i32, i32) {
    %c0_i32 = arith.constant 0 : i32
    %c0_i32_0 = arith.constant 0 : i32
    %c0_i32_1 = arith.constant 0 : i32
    return %c0_i32, %c0_i32_0 : i32, i32
  }
  func.func @transform_15(%arg0: i32) -> (i32, i32) {
    %c0_i32 = arith.constant 0 : i32
    %c0_i32_0 = arith.constant 0 : i32
    %c0_i32_1 = arith.constant 0 : i32
    return %c0_i32, %c0_i32_0 : i32, i32
  }
  func.func @transform_16(%arg0: i32) -> (i32, i32) {
    %c0_i32 = arith.constant 0 : i32
    %c0_i32_0 = arith.constant 0 : i32
    %c0_i32_1 = arith.constant 0 : i32
    return %c0_i32, %c0_i32_0 : i32, i32
  }
  func.func @transform_17(%arg0: i32) -> (i32, i32) {
    %c0_i32 = arith.constant 0 : i32
    %c0_i32_0 = arith.constant 0 : i32
    %c0_i32_1 = arith.constant 0 : i32
    return %c0_i32, %c0_i32_0 : i32, i32
  }
  func.func @transform_18(%arg0: i32) -> (i32, i32) {
    %c0_i32 = arith.constant 0 : i32
    %c0_i32_0 = arith.constant 0 : i32
    %c0_i32_1 = arith.constant 0 : i32
    return %c0_i32, %c0_i32_0 : i32, i32
  }
  func.func @transform_19(%arg0: i32) -> (i32, i32) {
    %c0_i32 = arith.constant 0 : i32
    %c0_i32_0 = arith.constant 0 : i32
    %c0_i32_1 = arith.constant 0 : i32
    return %c0_i32, %c0_i32_0 : i32, i32
  }
  func.func @transform_20(%arg0: i32) -> (i32, i32, i32) {
    %c0_i32 = arith.constant 0 : i32
    %c0_i32_0 = arith.constant 0 : i32
    %c0_i32_1 = arith.constant 0 : i32
    return %arg0, %c0_i32, %c0_i32_0 : i32, i32, i32
  }
}

</mosaic_0001>

<llo_original>
// kernel: gkt_forward.1
$region0: #{gkt_forward.1}
  #allocation0 [shape = 'u32[]', space=smem, size = 0x4, offset = 0x4, fixed_abs, tag = 'smem constant byte address 0x4 - core index']
  #allocation1 [shape = 'u32[144,128]{1,0:T(1,128)}', space=vmem, size = 0x12000, scoped, tag = 'internal scratch']
  #allocation2 [shape = 'f32[64,32]{1,0:T(8,128)}', space=vmem, size = 0x8000, scoped, tag = 'scratch operand']
  #allocation3 [shape = 'f32[1,1]{1,0:T(1,128)S(1)}', space=vmem, size = 0x200, scoped, tag = 'scoped memory for gkt_forward.1']
  %s0 = inlined_call_operand.vmem [shape: f32[8,4,32], index: 0, kind: input, shape index: {}]
  %s1 = inlined_call_operand.vmem [shape: f32[8,64,3], index: 1, kind: input, shape index: {}]
  %s2 = inlined_call_operand.vmem [shape: f32[8,4,4], index: 2, kind: input, shape index: {}]
  %s3 = inlined_call_operand.vmem [shape: bf16[64,64], index: 3, kind: input, shape index: {}]
  %s4 = inlined_call_operand.vmem [shape: f32[1,64], index: 4, kind: input, shape index: {}]
  %s5 = inlined_call_operand.vmem [shape: bf16[32,32], index: 5, kind: input, shape index: {}]
  %s6 = inlined_call_operand.vmem [shape: f32[3,32], index: 6, kind: input, shape index: {}]
  %s7 = inlined_call_operand.vmem [shape: bf16[32,128], index: 7, kind: input, shape index: {}]
  %s8 = inlined_call_operand.vmem [shape: bf16[32,32], index: 8, kind: input, shape index: {}]
  %s9 = inlined_call_operand.vmem [shape: bf16[32,32], index: 9, kind: input, shape index: {}]
  %s10 = inlined_call_operand.vmem [shape: f32[3,32], index: 10, kind: input, shape index: {}]
  %s11 = inlined_call_operand.vmem [shape: bf16[32,64], index: 11, kind: input, shape index: {}]
  %s12 = inlined_call_operand.vmem [shape: f32[1,64], index: 12, kind: input, shape index: {}]
  %s13 = inlined_call_operand.vmem [shape: f32[64,1], index: 13, kind: input, shape index: {}]
  %s14 = inlined_call_operand.vmem [shape: bf16[32,96], index: 14, kind: input, shape index: {}]
  %s15 = inlined_call_operand.vmem [shape: f32[2,96], index: 15, kind: input, shape index: {}]
  %s16 = inlined_call_operand.vmem [shape: bf16[64,4], index: 16, kind: input, shape index: {}]
  %s17 = inlined_call_operand.vmem [shape: f32[64,32], index: 17, kind: input, shape index: {}]
  %s18 = inlined_call_operand.vmem [shape: f32[1,32], index: 18, kind: input, shape index: {}]
  %s19 = inlined_call_operand.<no memory space> [shape: f32[1,1], index: 19, kind: input, shape index: {}]
  %s20 = inlined_call_operand.vmem [shape: f32[8,4,1], index: 20, kind: output, shape index: {}]
  %s21 = sld [smem:[#allocation0]]
  $region101: #{gkt_forward.1} parent=0
    _
  %s23 = ssub.s32 1, %s21
  %s24 = scalar_select 0, %s23, %s21
  %v25 = vstv %s19
  %26 = vst [vmem:[#allocation3] sm:$0x1] %v25
  // Predicated region
  $region2: #{gkt_forward.1} parent=0 // pred_check
    _
  $region3: #{gkt_forward.1} parent=0 // pred_check_branch
    %28 = sbr.rel (0) target = $region5
  $region4: #{gkt_forward.1} parent=0 // pred_region
    _
  $region5: #{gkt_forward.1} parent=0 // pred_fallthru
    _
  // Predicated region
  $region6: #{gkt_forward.1} parent=0 // pred_check
    _
  $region7: #{gkt_forward.1} parent=0 // pred_check_branch
    %30 = sbr.rel (0) target = $region9
  $region8: #{gkt_forward.1} parent=0 // pred_region
    _
  $region9: #{gkt_forward.1} parent=0 // pred_fallthru
    _
  // Predicated region
  $region10: #{gkt_forward.1} parent=0 // pred_check
    _
  $region11: #{gkt_forward.1} parent=0 // pred_check_branch
    %32 = sbr.rel (0) target = $region13
  $region12: #{gkt_forward.1} parent=0 // pred_region
    _
  $region13: #{gkt_forward.1} parent=0 // pred_fallthru
    _
  // Predicated region
  $region14: #{gkt_forward.1} parent=0 // pred_check
    _
  $region15: #{gkt_forward.1} parent=0 // pred_check_branch
    %34 = sbr.rel (0) target = $region17
  $region16: #{gkt_forward.1} parent=0 // pred_region
    _
  $region17: #{gkt_forward.1} parent=0 // pred_fallthru
    _
  // Predicated region
  $region18: #{gkt_forward.1} parent=0 // pred_check
    _
  $region19: #{gkt_forward.1} parent=0 // pred_check_branch
    %36 = sbr.rel (0) target = $region21
  $region20: #{gkt_forward.1} parent=0 // pred_region
    _
  $region21: #{gkt_forward.1} parent=0 // pred_fallthru
    _
  // Predicated region
  $region22: #{gkt_forward.1} parent=0 // pred_check
    _
  $region23: #{gkt_forward.1} parent=0 // pred_check_branch
    %38 = sbr.rel (0) target = $region25
  $region24: #{gkt_forward.1} parent=0 // pred_region
    _
  $region25: #{gkt_forward.1} parent=0 // pred_fallthru
    _
  // Predicated region
  $region26: #{gkt_forward.1} parent=0 // pred_check
    _
  $region27: #{gkt_forward.1} parent=0 // pred_check_branch
    %40 = sbr.rel (0) target = $region29
  $region28: #{gkt_forward.1} parent=0 // pred_region
    _
  $region29: #{gkt_forward.1} parent=0 // pred_fallthru
    _
  // Predicated region
  $region30: #{gkt_forward.1} parent=0 // pred_check
    _
  $region31: #{gkt_forward.1} parent=0 // pred_check_branch
    %42 = sbr.rel (0) target = $region33
  $region32: #{gkt_forward.1} parent=0 // pred_region
    _
  $region33: #{gkt_forward.1} parent=0 // pred_fallthru
    _
  // Predicated region
  $region34: #{gkt_forward.1} parent=0 // pred_check
    _
  $region35: #{gkt_forward.1} parent=0 // pred_check_branch
    %44 = sbr.rel (0) target = $region37
  $region36: #{gkt_forward.1} parent=0 // pred_region
    _
  $region37: #{gkt_forward.1} parent=0 // pred_fallthru
    _
  // Predicated region
  $region38: #{gkt_forward.1} parent=0 // pred_check
    _
  $region39: #{gkt_forward.1} parent=0 // pred_check_branch
    %46 = sbr.rel (0) target = $region41
  $region40: #{gkt_forward.1} parent=0 // pred_region
    _
  $region41: #{gkt_forward.1} parent=0 // pred_fallthru
    _
  // Predicated region
  $region42: #{gkt_forward.1} parent=0 // pred_check
    _
  $region43: #{gkt_forward.1} parent=0 // pred_check_branch
    %48 = sbr.rel (0) target = $region45
  $region44: #{gkt_forward.1} parent=0 // pred_region
    _
  $region45: #{gkt_forward.1} parent=0 // pred_fallthru
    _
  // Predicated region
  $region46: #{gkt_forward.1} parent=0 // pred_check
    _
  $region47: #{gkt_forward.1} parent=0 // pred_check_branch
    %50 = sbr.rel (0) target = $region49
  $region48: #{gkt_forward.1} parent=0 // pred_region
    _
  $region49: #{gkt_forward.1} parent=0 // pred_fallthru
    _
  // Predicated region
  $region50: #{gkt_forward.1} parent=0 // pred_check
    _
  $region51: #{gkt_forward.1} parent=0 // pred_check_branch
    %52 = sbr.rel (0) target = $region53
  $region52: #{gkt_forward.1} parent=0 // pred_region
    _
  $region53: #{gkt_forward.1} parent=0 // pred_fallthru
    _
  // Predicated region
  $region54: #{gkt_forward.1} parent=0 // pred_check
    _
  $region55: #{gkt_forward.1} parent=0 // pred_check_branch
    %54 = sbr.rel (0) target = $region57
  $region56: #{gkt_forward.1} parent=0 // pred_region
    _
  $region57: #{gkt_forward.1} parent=0 // pred_fallthru
    _
  // Predicated region
  $region58: #{gkt_forward.1} parent=0 // pred_check
    _
  $region59: #{gkt_forward.1} parent=0 // pred_check_branch
    %56 = sbr.rel (0) target = $region61
  $region60: #{gkt_forward.1} parent=0 // pred_region
    _
  $region61: #{gkt_forward.1} parent=0 // pred_fallthru
    _
  // Predicated region
  $region62: #{gkt_forward.1} parent=0 // pred_check
    _
  $region63: #{gkt_forward.1} parent=0 // pred_check_branch
    %58 = sbr.rel (0) target = $region65
  $region64: #{gkt_forward.1} parent=0 // pred_region
    _
  $region65: #{gkt_forward.1} parent=0 // pred_fallthru
    _
  // Predicated region
  $region66: #{gkt_forward.1} parent=0 // pred_check
    _
  $region67: #{gkt_forward.1} parent=0 // pred_check_branch
    %60 = sbr.rel (0) target = $region69
  $region68: #{gkt_forward.1} parent=0 // pred_region
    _
  $region69: #{gkt_forward.1} parent=0 // pred_fallthru
    _
  // Predicated region
  $region70: #{gkt_forward.1} parent=0 // pred_check
    _
  $region71: #{gkt_forward.1} parent=0 // pred_check_branch
    %62 = sbr.rel (0) target = $region73
  $region72: #{gkt_forward.1} parent=0 // pred_region
    _
  $region73: #{gkt_forward.1} parent=0 // pred_fallthru
    _
  // Predicated region
  $region74: #{gkt_forward.1} parent=0 // pred_check
    _
  $region75: #{gkt_forward.1} parent=0 // pred_check_branch
    %64 = sbr.rel (0) target = $region77
  $region76: #{gkt_forward.1} parent=0 // pred_region
    _
  $region77: #{gkt_forward.1} parent=0 // pred_fallthru
    _
  // Predicated region
  $region78: #{gkt_forward.1} parent=0 // pred_check
    _
  $region79: #{gkt_forward.1} parent=0 // pred_check_branch
    %66 = sbr.rel (0) target = $region81
  $region80: #{gkt_forward.1} parent=0 // pred_region
    _
  $region81: #{gkt_forward.1} parent=0 // pred_fallthru
    _
  %p68 = scmp.eq.s32.totalorder 0, 0
  // Predicated region
  $region82: #{gkt_forward.1} parent=0 // pred_check
    %p69 = pneg %p68
  $region83: #{gkt_forward.1} parent=0 // pred_check_branch
    %71 = sbr.rel (%p69) target = $region85
  $region84: #{gkt_forward.1} parent=0 // pred_region
    %vm72 = vcmask 261120
    %73 = vst.msk [vmem:[#allocation2] sm:$0xff] %vm72, 0.0
    %74 = vst.msk [vmem:[#allocation2 + $0x8] sm:$0xff] %vm72, 0.0
    %75 = vst.msk [vmem:[#allocation2 + $0x10] sm:$0xff] %vm72, 0.0
    %76 = vst.msk [vmem:[#allocation2 + $0x18] sm:$0xff] %vm72, 0.0
    %77 = vst.msk [vmem:[#allocation2 + $0x20] sm:$0xff] %vm72, 0.0
    %78 = vst.msk [vmem:[#allocation2 + $0x28] sm:$0xff] %vm72, 0.0
    %79 = vst.msk [vmem:[#allocation2 + $0x30] sm:$0xff] %vm72, 0.0
    %80 = vst.msk [vmem:[#allocation2 + $0x38] sm:$0xff] %vm72, 0.0
  $region85: #{gkt_forward.1} parent=0 // pred_fallthru
    _
  %v81 = vlaneseq
  %v82 = vand.u32 %v81, 127
  loop: start=0, step=1, limit=8
  $region86: #{gkt_forward.1} parent=0 // loop_pre_header
    _
  $region87: #{gkt_forward.1} parent=0 // loop_header
    %s84 = sphi 0, %s88
    %p85 = scmp.ge.s32.totalorder %s84, 8
  $region88: #{gkt_forward.1} parent=0 // loop_header_branch
    %87 = sbr.rel (%p85) target = $region92
  $region89: #{gkt_forward.1} parent=0 // loop_body
    %s89 = smul.u32 %s84, 4
    %s90 = scalar_lea.vmem %s0, %s89
    %v91 = vld [vmem:[%s90] sm:$0xf]
    %s92 = smul.u32 %s84, 64
    %s93 = scalar_lea.vmem %s1, %s92
    %v94 = vld [vmem:[%s93] sm:$0xff]
    %v95 = vld [vmem:[%s93 + $0x8] sm:$0xff]
    %v96 = vld [vmem:[%s93 + $0x10] sm:$0xff]
    %v97 = vld [vmem:[%s93 + $0x18] sm:$0xff]
    %v98 = vld [vmem:[%s93 + $0x20] sm:$0xff]
    %v99 = vld [vmem:[%s93 + $0x28] sm:$0xff]
    %v100 = vld [vmem:[%s93 + $0x30] sm:$0xff]
    %v101 = vld [vmem:[%s93 + $0x38] sm:$0xff]
    %s102 = scalar_lea.vmem %s2, %s89
    %v103 = vld [vmem:[%s102] sm:$0xf]
    %v104 = vcvt.f32.s32.to.zero.pseudo %v103
    %v105 = vld [vmem:[#allocation2] sm:$0xff]
    %v106 = vld [vmem:[#allocation2 + $0x8] sm:$0xff]
    %v107 = vld [vmem:[#allocation2 + $0x10] sm:$0xff]
    %v108 = vld [vmem:[#allocation2 + $0x18] sm:$0xff]
    %v109 = vld [vmem:[#allocation2 + $0x20] sm:$0xff]
    %v110 = vld [vmem:[#allocation2 + $0x28] sm:$0xff]
    %v111 = vld [vmem:[#allocation2 + $0x30] sm:$0xff]
    %v112 = vld [vmem:[#allocation2 + $0x38] sm:$0xff]
    %v113 = vpack.c.bf16 %v106, %v105
    %v114 = vpack.c.bf16 %v108, %v107
    %v115 = vpack.c.bf16 %v110, %v109
    %v116 = vpack.c.bf16 %v112, %v111
    %117 = vset.pattern.permute.xlu0 0
    %118 = vperm.xlu0 %117, %v104
    %v119 = vpop.permute.xlu0 %118
    %vm120 = vcmp.eq.s32.totalorder %v82, %v119
    %v121 = vsel %vm120, 1, 0
    %v122 = vcvt.s32.f32 %v121
    %v123 = vpack.c.bf16 %v122, %v122
    %vm124 = vcmask 523264
    %v126 = vsel %vm124, %v123, 0
    %128 = vmatprep.subr.bf16.mxu0 0
    %129 = vmatpush1.bf16.msra.mxu0 0
    %130 = vmatprep.subr.bf16.mxu0 0
    %131 = vmatpush1.bf16.msra.mxu0 0
    %132 = vmatprep.subr.bf16.mxu0 0
    %133 = vmatpush1.bf16.msra.mxu0 0
    %134 = vmatprep.subr.bf16.mxu0 0
    %135 = vmatpush1.bf16.msra.mxu0 0
    %136 = vmatprep.subr.bf16.mxu0 0
    %137 = vmatpush1.bf16.msra.mxu0 %v116
    %138 = vmatprep.subr.bf16.mxu0 0
    %139 = vmatpush1.bf16.msra.mxu0 %v115
    %140 = vmatprep.subr.bf16.mxu0 0
    %141 = vmatpush1.bf16.msra.mxu0 %v114
    %142 = vmatprep.subr.bf16.mxu0 0
    %143 = vmatpush1.bf16.msra.mxu0 %v113
    %144 = vmatprep.subr.bf16.mxu0 0
    %145 = vmatpush2.bf16.msra.mxu0 0
    %146 = vmatprep.subr.bf16.mxu0 0
    %147 = vmatpush2.bf16.msra.mxu0 0
    %148 = vmatprep.subr.bf16.mxu0 0
    %149 = vmatpush2.bf16.msra.mxu0 0
    %150 = vmatprep.subr.bf16.mxu0 0
    %151 = vmatpush2.bf16.msra.mxu0 0
    %152 = vmatprep.subr.bf16.mxu0 0
    %153 = vmatpush2.bf16.msra.mxu0 0
    %154 = vmatprep.subr.bf16.mxu0 0
    %155 = vmatpush2.bf16.msra.mxu0 0
    %156 = vmatprep.subr.bf16.mxu0 0
    %157 = vmatpush2.bf16.msra.mxu0 0
    %158 = vmatprep.subr.bf16.mxu0 0
    %159 = vmatpush2.bf16.msra.mxu0 0
    %160 = vmatprep.mubr.bf16.mxu0 0
    %161 = vmatmul.mubr.bf16.gmra.mxu0 %v126
    %v162 = vpop.f32.mrf.mxu0
    %v163 = vadd.f32 0.0, %v162
    %v164 = vpop.f32.mrf.mxu0
    %v165 = vpop.f32.mrf.mxu0
    %v166 = vpop.f32.mrf.mxu0
    %167 = vdwg.mxu0
    %169 = vrot.lane.b32.xlu0 %v91, 32
    %v170 = vpop.permute.xlu0 %169
    %vm172 = vcmask 261120
    %v173 = vsel %vm172, %v163, %v170
    %v174 = vpack.c.bf16 %v173, %v173
    %v175 = vld [vmem:[%s3] sm:$0xf]
    %v176 = vld [vmem:[%s3 + $0x4] sm:$0xf]
    %v177 = vld [vmem:[%s3 + $0x8] sm:$0xf]
    %v178 = vld [vmem:[%s3 + $0xc] sm:$0xf]
    %v179 = vld [vmem:[%s3 + $0x10] sm:$0xf]
    %v180 = vld [vmem:[%s3 + $0x14] sm:$0xf]
    %v181 = vld [vmem:[%s3 + $0x18] sm:$0xf]
    %v182 = vld [vmem:[%s3 + $0x1c] sm:$0xf]
    %v183 = vld [vmem:[%s4] sm:$0x1]
    %v185 = vlaneseq
    %v186 = vshrl.u32 %v185, 7
    %v187 = vsub.s32 0, %v186
    %v188 = vrot.slane %v183, %v187
    %v198 = vunpack.c.l.b16 %v175
    %v199 = vunpack.c.l.b16 %v176
    %v200 = vunpack.c.l.b16 %v177
    %v201 = vunpack.c.l.b16 %v178
    %v202 = vunpack.c.l.b16 %v179
    %v203 = vunpack.c.l.b16 %v180
    %v204 = vunpack.c.l.b16 %v181
    %v205 = vunpack.c.l.b16 %v182
    %v206 = vpack.c.b16 %v199, %v198
    %v207 = vpack.c.b16 %v201, %v200
    %v208 = vpack.c.b16 %v203, %v202
    %v209 = vpack.c.b16 %v205, %v204
    %v215 = vsel %vm124, %v174, 0
    %217 = vmatprep.subr.bf16.mxu0 0
    %218 = vmatpush1.bf16.msra.mxu0 0
    %219 = vmatprep.subr.bf16.mxu0 0
    %220 = vmatpush1.bf16.msra.mxu0 0
    %221 = vmatprep.subr.bf16.mxu0 0
    %222 = vmatpush1.bf16.msra.mxu0 0
    %223 = vmatprep.subr.bf16.mxu0 0
    %224 = vmatpush1.bf16.msra.mxu0 0
    %225 = vmatprep.subr.bf16.mxu0 0
    %226 = vmatpush1.bf16.msra.mxu0 %v209
    %227 = vmatprep.subr.bf16.mxu0 0
    %228 = vmatpush1.bf16.msra.mxu0 %v208
    %229 = vmatprep.subr.bf16.mxu0 0
    %230 = vmatpush1.bf16.msra.mxu0 %v207
    %231 = vmatprep.subr.bf16.mxu0 0
    %232 = vmatpush1.bf16.msra.mxu0 %v206
    %233 = vmatprep.subr.bf16.mxu0 0
    %234 = vmatpush2.bf16.msra.mxu0 0
    %235 = vmatprep.subr.bf16.mxu0 0
    %236 = vmatpush2.bf16.msra.mxu0 0
    %237 = vmatprep.subr.bf16.mxu0 0
    %238 = vmatpush2.bf16.msra.mxu0 0
    %239 = vmatprep.subr.bf16.mxu0 0
    %240 = vmatpush2.bf16.msra.mxu0 0
    %241 = vmatprep.subr.bf16.mxu0 0
    %242 = vmatpush2.bf16.msra.mxu0 0
    %243 = vmatprep.subr.bf16.mxu0 0
    %244 = vmatpush2.bf16.msra.mxu0 0
    %245 = vmatprep.subr.bf16.mxu0 0
    %246 = vmatpush2.bf16.msra.mxu0 0
    %247 = vmatprep.subr.bf16.mxu0 0
    %248 = vmatpush2.bf16.msra.mxu0 0
    %249 = vmatprep.mubr.bf16.mxu0 0
    %250 = vmatmul.mubr.bf16.gmra.mxu0 %v215
    %v251 = vpop.f32.mrf.mxu0
    %v252 = vadd.f32 %v188, %v251
    %v253 = vpop.f32.mrf.mxu0
    %v254 = vpop.f32.mrf.mxu0
    %v255 = vpop.f32.mrf.mxu0
    %256 = vdwg.mxu0
    %v257 = vmax.f32 %v252, 0.0
    %v258 = vpack.c.bf16 %v257, %v257
    %v259 = vld [vmem:[%s5] sm:$0xf]
    %v260 = vld [vmem:[%s5 + $0x4] sm:$0xf]
    %v261 = vld [vmem:[%s5 + $0x8] sm:$0xf]
    %v262 = vld [vmem:[%s5 + $0xc] sm:$0xf]
    %v263 = vld [vmem:[%s6] sm:$0x1]
    %v264 = vlaneseq
    %v265 = vshrl.u32 %v264, 7
    %v266 = vsub.s32 0, %v265
    %v267 = vrot.slane %v263, %v266
    %v272 = vunpack.c.l.b16 %v259
    %v273 = vunpack.c.l.b16 %v260
    %v274 = vunpack.c.l.b16 %v261
    %v275 = vunpack.c.l.b16 %v262
    %v276 = vpack.c.b16 %v273, %v272
    %v277 = vpack.c.b16 %v275, %v274
    %v281 = vsel %vm172, %v258, 0
    %283 = vmatprep.subr.bf16.mxu0 0
    %284 = vmatpush1.bf16.msra.mxu0 0
    %285 = vmatprep.subr.bf16.mxu0 0
    %286 = vmatpush1.bf16.msra.mxu0 0
    %287 = vmatprep.subr.bf16.mxu0 0
    %288 = vmatpush1.bf16.msra.mxu0 0
    %289 = vmatprep.subr.bf16.mxu0 0
    %290 = vmatpush1.bf16.msra.mxu0 0
    %291 = vmatprep.subr.bf16.mxu0 0
    %292 = vmatpush1.bf16.msra.mxu0 0
    %293 = vmatprep.subr.bf16.mxu0 0
    %294 = vmatpush1.bf16.msra.mxu0 0
    %295 = vmatprep.subr.bf16.mxu0 0
    %296 = vmatpush1.bf16.msra.mxu0 %v277
    %297 = vmatprep.subr.bf16.mxu0 0
    %298 = vmatpush1.bf16.msra.mxu0 %v276
    %299 = vmatprep.subr.bf16.mxu0 0
    %300 = vmatpush2.bf16.msra.mxu0 0
    %301 = vmatprep.subr.bf16.mxu0 0
    %302 = vmatpush2.bf16.msra.mxu0 0
    %303 = vmatprep.subr.bf16.mxu0 0
    %304 = vmatpush2.bf16.msra.mxu0 0
    %305 = vmatprep.subr.bf16.mxu0 0
    %306 = vmatpush2.bf16.msra.mxu0 0
    %307 = vmatprep.subr.bf16.mxu0 0
    %308 = vmatpush2.bf16.msra.mxu0 0
    %309 = vmatprep.subr.bf16.mxu0 0
    %310 = vmatpush2.bf16.msra.mxu0 0
    %311 = vmatprep.subr.bf16.mxu0 0
    %312 = vmatpush2.bf16.msra.mxu0 0
    %313 = vmatprep.subr.bf16.mxu0 0
    %314 = vmatpush2.bf16.msra.mxu0 0
    %315 = vmatprep.mubr.bf16.mxu0 0
    %316 = vmatmul.mubr.bf16.gmra.mxu0 %v281
    %v317 = vpop.f32.mrf.mxu0
    %v318 = vadd.f32 %v267, %v317
    %v319 = vpop.f32.mrf.mxu0
    %v320 = vpop.f32.mrf.mxu0
    %v321 = vpop.f32.mrf.mxu0
    %322 = vdwg.mxu0
    %v323 = vmax.f32 %v318, 0.0
    %v324 = vld [vmem:[%s6 + $0x1] sm:$0x1]
    %v325 = vlaneseq
    %v326 = vshrl.u32 %v325, 7
    %v327 = vsub.s32 0, %v326
    %v328 = vrot.slane %v324, %v327
    %v329 = vmul.f32 %v323, %v328
    %v330 = vld [vmem:[%s6 + $0x2] sm:$0x1]
    %v331 = vlaneseq
    %v332 = vshrl.u32 %v331, 7
    %v333 = vsub.s32 0, %v332
    %v334 = vrot.slane %v330, %v333
    %v335 = vadd.f32 %v329, %v334
    %337 = vrot.lane.b32.xlu0 %v252, 96
    %v338 = vpop.permute.xlu0 %337
    %341 = vrot.lane.b32.xlu0 %v335, 32
    %v342 = vpop.permute.xlu0 %341
    %344 = vrot.lane.b32.xlu0 %v91, 64
    %v345 = vpop.permute.xlu0 %344
    %v347 = vsel %vm172, %v338, %v342
    %v348 = vsel %vm124, %v347, %v345
    %v349 = vld [vmem:[%s16] sm:$0xf]
    %v350 = vld [vmem:[%s16 + $0x4] sm:$0xf]
    %v351 = vld [vmem:[%s16 + $0x8] sm:$0xf]
    %v352 = vld [vmem:[%s16 + $0xc] sm:$0xf]
    %v353 = vld [vmem:[%s16 + $0x10] sm:$0xf]
    %v354 = vld [vmem:[%s16 + $0x14] sm:$0xf]
    %v355 = vld [vmem:[%s16 + $0x18] sm:$0xf]
    %v356 = vld [vmem:[%s16 + $0x1c] sm:$0xf]
    %v357 = vpack.c.bf16 %v348, %v348
    %v366 = vunpack.c.l.b16 %v349
    %v367 = vunpack.c.l.b16 %v350
    %v368 = vunpack.c.l.b16 %v351
    %v369 = vunpack.c.l.b16 %v352
    %v370 = vunpack.c.l.b16 %v353
    %v371 = vunpack.c.l.b16 %v354
    %v372 = vunpack.c.l.b16 %v355
    %v373 = vunpack.c.l.b16 %v356
    %v374 = vpack.c.b16 %v367, %v366
    %v375 = vpack.c.b16 %v369, %v368
    %v376 = vpack.c.b16 %v371, %v370
    %v377 = vpack.c.b16 %v373, %v372
    %vm378 = vcmask 31744
    %v380 = vsel %vm378, %v374, 0
    %v383 = vsel %vm378, %v375, 0
    %v386 = vsel %vm378, %v376, 0
    %v389 = vsel %vm378, %v377, 0
    %vm391 = vcmask 1041408
    %v393 = vsel %vm391, %v357, 0
    %395 = vmatprep.subr.bf16.mxu0 0
    %396 = vmatpush1.bf16.msra.mxu0 0
    %397 = vmatprep.subr.bf16.mxu0 0
    %398 = vmatpush1.bf16.msra.mxu0 0
    %399 = vmatprep.subr.bf16.mxu0 0
    %400 = vmatpush1.bf16.msra.mxu0 0
    %401 = vmatprep.subr.bf16.mxu0 0
    %402 = vmatpush1.bf16.msra.mxu0 0
    %403 = vmatprep.subr.bf16.mxu0 0
    %404 = vmatpush1.bf16.msra.mxu0 0
    %405 = vmatprep.subr.bf16.mxu0 0
    %406 = vmatpush1.bf16.msra.mxu0 0
    %407 = vmatprep.subr.bf16.mxu0 0
    %408 = vmatpush1.bf16.msra.mxu0 0
    %409 = vmatprep.subr.bf16.mxu0 0
    %410 = vmatpush1.bf16.msra.mxu0 %v393
    %411 = vmatprep.subr.bf16.mxu0 0
    %412 = vmatpush2.bf16.msra.mxu0 0
    %413 = vmatprep.subr.bf16.mxu0 0
    %414 = vmatpush2.bf16.msra.mxu0 0
    %415 = vmatprep.subr.bf16.mxu0 0
    %416 = vmatpush2.bf16.msra.mxu0 0
    %417 = vmatprep.subr.bf16.mxu0 0
    %418 = vmatpush2.bf16.msra.mxu0 0
    %419 = vmatprep.subr.bf16.mxu0 0
    %420 = vmatpush2.bf16.msra.mxu0 0
    %421 = vmatprep.subr.bf16.mxu0 0
    %422 = vmatpush2.bf16.msra.mxu0 0
    %423 = vmatprep.subr.bf16.mxu0 0
    %424 = vmatpush2.bf16.msra.mxu0 0
    %425 = vmatprep.subr.bf16.mxu0 0
    %426 = vmatpush2.bf16.msra.mxu0 0
    %427 = vmatprep.mubr.bf16.mxu0 0
    %428 = vmatmul.mubr.bf16.gmra.mxu0 %v380
    %v429 = vpop.f32.mrf.mxu0
    %v430 = vadd.f32 0.0, %v429
    %v431 = vpop.f32.mrf.mxu0
    %v432 = vpop.f32.mrf.mxu0
    %v433 = vadd.f32 0.0, %v432
    %v434 = vpop.f32.mrf.mxu0
    %435 = vmatprep.mubr.bf16.mxu0 0
    %436 = vmatmul.mubr.bf16.gmra.mxu0 %v383
    %v437 = vpop.f32.mrf.mxu0
    %v438 = vadd.f32 0.0, %v437
    %v439 = vpop.f32.mrf.mxu0
    %v440 = vpop.f32.mrf.mxu0
    %v441 = vadd.f32 0.0, %v440
    %v442 = vpop.f32.mrf.mxu0
    %443 = vmatprep.mubr.bf16.mxu0 0
    %444 = vmatmul.mubr.bf16.gmra.mxu0 %v386
    %v445 = vpop.f32.mrf.mxu0
    %v446 = vadd.f32 0.0, %v445
    %v447 = vpop.f32.mrf.mxu0
    %v448 = vpop.f32.mrf.mxu0
    %v449 = vadd.f32 0.0, %v448
    %v450 = vpop.f32.mrf.mxu0
    %451 = vmatprep.mubr.bf16.mxu0 0
    %452 = vmatmul.mubr.bf16.gmra.mxu0 %v389
    %v453 = vpop.f32.mrf.mxu0
    %v454 = vadd.f32 0.0, %v453
    %v455 = vpop.f32.mrf.mxu0
    %v456 = vpop.f32.mrf.mxu0
    %v457 = vadd.f32 0.0, %v456
    %v458 = vpop.f32.mrf.mxu0
    %459 = vdwg.mxu0
    %vm460 = vcmp.gt.f32.partialorder %v94, 0.0
    %vm461 = vcmp.gt.f32.partialorder %v95, 0.0
    %vm462 = vcmp.gt.f32.partialorder %v96, 0.0
    %vm463 = vcmp.gt.f32.partialorder %v97, 0.0
    %vm464 = vcmp.gt.f32.partialorder %v98, 0.0
    %vm465 = vcmp.gt.f32.partialorder %v99, 0.0
    %vm466 = vcmp.gt.f32.partialorder %v100, 0.0
    %vm467 = vcmp.gt.f32.partialorder %v101, 0.0
    %v468 = vld [vmem:[%s17] sm:$0xff]
    %v469 = vld [vmem:[%s17 + $0x8] sm:$0xff]
    %v470 = vld [vmem:[%s17 + $0x10] sm:$0xff]
    %v471 = vld [vmem:[%s17 + $0x18] sm:$0xff]
    %v472 = vld [vmem:[%s17 + $0x20] sm:$0xff]
    %v473 = vld [vmem:[%s17 + $0x28] sm:$0xff]
    %v474 = vld [vmem:[%s17 + $0x30] sm:$0xff]
    %v475 = vld [vmem:[%s17 + $0x38] sm:$0xff]
    %477 = vset.pattern.permute.xlu0 2
    %478 = vperm.xlu0 %477, %v94
    %v479 = vpop.permute.xlu0 %478
    %482 = vset.pattern.permute.xlu0 2
    %483 = vperm.xlu0 %482, %v95
    %v484 = vpop.permute.xlu0 %483
    %487 = vset.pattern.permute.xlu0 2
    %488 = vperm.xlu0 %487, %v96
    %v489 = vpop.permute.xlu0 %488
    %492 = vset.pattern.permute.xlu0 2
    %493 = vperm.xlu0 %492, %v97
    %v494 = vpop.permute.xlu0 %493
    %497 = vset.pattern.permute.xlu0 2
    %498 = vperm.xlu0 %497, %v98
    %v499 = vpop.permute.xlu0 %498
    %502 = vset.pattern.permute.xlu0 2
    %503 = vperm.xlu0 %502, %v99
    %v504 = vpop.permute.xlu0 %503
    %507 = vset.pattern.permute.xlu0 2
    %508 = vperm.xlu0 %507, %v100
    %v509 = vpop.permute.xlu0 %508
    %512 = vset.pattern.permute.xlu0 2
    %513 = vperm.xlu0 %512, %v101
    %v514 = vpop.permute.xlu0 %513
    %v516 = vmul.f32 %v468, %v479
    %v517 = vmul.f32 %v469, %v484
    %v518 = vmul.f32 %v470, %v489
    %v519 = vmul.f32 %v471, %v494
    %v520 = vmul.f32 %v472, %v499
    %v521 = vmul.f32 %v473, %v504
    %v522 = vmul.f32 %v474, %v509
    %v523 = vmul.f32 %v475, %v514
    %v524 = vsel %vm460, 1, 0
    %v525 = vsel %vm461, 1, 0
    %v526 = vsel %vm462, 1, 0
    %v527 = vsel %vm463, 1, 0
    %v528 = vsel %vm464, 1, 0
    %v529 = vsel %vm465, 1, 0
    %v530 = vsel %vm466, 1, 0
    %v531 = vsel %vm467, 1, 0
    %532 = vset.pattern.permute.xlu0 1
    %533 = vperm.xlu0 %532, %v524
    %v534 = vpop.permute.xlu0 %533
    %535 = vset.pattern.permute.xlu0 1
    %536 = vperm.xlu0 %535, %v525
    %v537 = vpop.permute.xlu0 %536
    %538 = vset.pattern.permute.xlu0 1
    %539 = vperm.xlu0 %538, %v526
    %v540 = vpop.permute.xlu0 %539
    %541 = vset.pattern.permute.xlu0 1
    %542 = vperm.xlu0 %541, %v527
    %v543 = vpop.permute.xlu0 %542
    %544 = vset.pattern.permute.xlu0 1
    %545 = vperm.xlu0 %544, %v528
    %v546 = vpop.permute.xlu0 %545
    %547 = vset.pattern.permute.xlu0 1
    %548 = vperm.xlu0 %547, %v529
    %v549 = vpop.permute.xlu0 %548
    %550 = vset.pattern.permute.xlu0 1
    %551 = vperm.xlu0 %550, %v530
    %v552 = vpop.permute.xlu0 %551
    %553 = vset.pattern.permute.xlu0 1
    %554 = vperm.xlu0 %553, %v531
    %v555 = vpop.permute.xlu0 %554
    %vm556 = vcmp.eq.s32.totalorder %v534, 1
    %vm557 = vcmp.eq.s32.totalorder %v537, 1
    %vm558 = vcmp.eq.s32.totalorder %v540, 1
    %vm559 = vcmp.eq.s32.totalorder %v543, 1
    %vm560 = vcmp.eq.s32.totalorder %v546, 1
    %vm561 = vcmp.eq.s32.totalorder %v549, 1
    %vm562 = vcmp.eq.s32.totalorder %v552, 1
    %vm563 = vcmp.eq.s32.totalorder %v555, 1
    %572 = vrot.lane.b32.xlu0 %v516, 64
    %v573 = vpop.permute.xlu0 %572
    %574 = vrot.lane.b32.xlu0 %v517, 64
    %v575 = vpop.permute.xlu0 %574
    %576 = vrot.lane.b32.xlu0 %v518, 64
    %v577 = vpop.permute.xlu0 %576
    %578 = vrot.lane.b32.xlu0 %v519, 64
    %v579 = vpop.permute.xlu0 %578
    %580 = vrot.lane.b32.xlu0 %v520, 64
    %v581 = vpop.permute.xlu0 %580
    %582 = vrot.lane.b32.xlu0 %v521, 64
    %v583 = vpop.permute.xlu0 %582
    %584 = vrot.lane.b32.xlu0 %v522, 64
    %v585 = vpop.permute.xlu0 %584
    %586 = vrot.lane.b32.xlu0 %v523, 64
    %v587 = vpop.permute.xlu0 %586
    %v596 = vsel %vm556, %v430, %v573
    %v597 = vsel %vm557, %v433, %v575
    %v598 = vsel %vm558, %v438, %v577
    %v599 = vsel %vm559, %v441, %v579
    %v600 = vsel %vm560, %v446, %v581
    %v601 = vsel %vm561, %v449, %v583
    %v602 = vsel %vm562, %v454, %v585
    %v603 = vsel %vm563, %v457, %v587
    %v604 = vld [vmem:[%s7] sm:$0xf]
    %v605 = vld [vmem:[%s7 + $0x4] sm:$0xf]
    %v606 = vld [vmem:[%s7 + $0x8] sm:$0xf]
    %v607 = vld [vmem:[%s7 + $0xc] sm:$0xf]
    %v612 = vunpack.c.l.b16 %v604
    %v613 = vunpack.c.l.b16 %v605
    %v614 = vunpack.c.l.b16 %v606
    %v615 = vunpack.c.l.b16 %v607
    %v616 = vpack.c.b16 %v613, %v612
    %v617 = vpack.c.b16 %v615, %v614
    %v621 = vsel %vm172, %v113, 0
    %v624 = vsel %vm172, %v114, 0
    %v627 = vsel %vm172, %v115, 0
    %v630 = vsel %vm172, %v116, 0
    %632 = vmatprep.subr.bf16.mxu0 0
    %633 = vmatpush1.bf16.msra.mxu0 0
    %634 = vmatprep.subr.bf16.mxu0 0
    %635 = vmatpush1.bf16.msra.mxu0 0
    %636 = vmatprep.subr.bf16.mxu0 0
    %637 = vmatpush1.bf16.msra.mxu0 0
    %638 = vmatprep.subr.bf16.mxu0 0
    %639 = vmatpush1.bf16.msra.mxu0 0
    %640 = vmatprep.subr.bf16.mxu0 0
    %641 = vmatpush1.bf16.msra.mxu0 0
    %642 = vmatprep.subr.bf16.mxu0 0
    %643 = vmatpush1.bf16.msra.mxu0 0
    %644 = vmatprep.subr.bf16.mxu0 0
    %645 = vmatpush1.bf16.msra.mxu0 %v617
    %646 = vmatprep.subr.bf16.mxu0 0
    %647 = vmatpush1.bf16.msra.mxu0 %v616
    %648 = vmatprep.subr.bf16.mxu0 0
    %649 = vmatpush2.bf16.msra.mxu0 0
    %650 = vmatprep.subr.bf16.mxu0 0
    %651 = vmatpush2.bf16.msra.mxu0 0
    %652 = vmatprep.subr.bf16.mxu0 0
    %653 = vmatpush2.bf16.msra.mxu0 0
    %654 = vmatprep.subr.bf16.mxu0 0
    %655 = vmatpush2.bf16.msra.mxu0 0
    %656 = vmatprep.subr.bf16.mxu0 0
    %657 = vmatpush2.bf16.msra.mxu0 0
    %658 = vmatprep.subr.bf16.mxu0 0
    %659 = vmatpush2.bf16.msra.mxu0 0
    %660 = vmatprep.subr.bf16.mxu0 0
    %661 = vmatpush2.bf16.msra.mxu0 0
    %662 = vmatprep.subr.bf16.mxu0 0
    %663 = vmatpush2.bf16.msra.mxu0 0
    %664 = vmatprep.mubr.bf16.mxu0 0
    %665 = vmatmul.mubr.bf16.gmra.mxu0 %v621
    %v666 = vpop.f32.mrf.mxu0
    %v667 = vadd.f32 0.0, %v666
    %v668 = vpop.f32.mrf.mxu0
    %v669 = vpop.f32.mrf.mxu0
    %v670 = vadd.f32 0.0, %v669
    %v671 = vpop.f32.mrf.mxu0
    %672 = vmatprep.mubr.bf16.mxu0 0
    %673 = vmatmul.mubr.bf16.gmra.mxu0 %v624
    %v674 = vpop.f32.mrf.mxu0
    %v675 = vadd.f32 0.0, %v674
    %v676 = vpop.f32.mrf.mxu0
    %v677 = vpop.f32.mrf.mxu0
    %v678 = vadd.f32 0.0, %v677
    %v679 = vpop.f32.mrf.mxu0
    %680 = vmatprep.mubr.bf16.mxu0 0
    %681 = vmatmul.mubr.bf16.gmra.mxu0 %v627
    %v682 = vpop.f32.mrf.mxu0
    %v683 = vadd.f32 0.0, %v682
    %v684 = vpop.f32.mrf.mxu0
    %v685 = vpop.f32.mrf.mxu0
    %v686 = vadd.f32 0.0, %v685
    %v687 = vpop.f32.mrf.mxu0
    %688 = vmatprep.mubr.bf16.mxu0 0
    %689 = vmatmul.mubr.bf16.gmra.mxu0 %v630
    %v690 = vpop.f32.mrf.mxu0
    %v691 = vadd.f32 0.0, %v690
    %v692 = vpop.f32.mrf.mxu0
    %v693 = vpop.f32.mrf.mxu0
    %v694 = vadd.f32 0.0, %v693
    %v695 = vpop.f32.mrf.mxu0
    %696 = vdwg.mxu0
    %v697 = vpack.c.bf16 %v597, %v596
    %v698 = vpack.c.bf16 %v599, %v598
    %v699 = vpack.c.bf16 %v601, %v600
    %v700 = vpack.c.bf16 %v603, %v602
    %v701 = vld [vmem:[%s8] sm:$0xf]
    %v702 = vld [vmem:[%s8 + $0x4] sm:$0xf]
    %v703 = vld [vmem:[%s8 + $0x8] sm:$0xf]
    %v704 = vld [vmem:[%s8 + $0xc] sm:$0xf]
    %709 = vrot.lane.b32.xlu0 %v697, 64
    %v710 = vpop.permute.xlu0 %709
    %711 = vrot.lane.b32.xlu0 %v698, 64
    %v712 = vpop.permute.xlu0 %711
    %713 = vrot.lane.b32.xlu0 %v699, 64
    %v714 = vpop.permute.xlu0 %713
    %715 = vrot.lane.b32.xlu0 %v700, 64
    %v716 = vpop.permute.xlu0 %715
    %v721 = vunpack.c.l.b16 %v701
    %v722 = vunpack.c.l.b16 %v702
    %v723 = vunpack.c.l.b16 %v703
    %v724 = vunpack.c.l.b16 %v704
    %v725 = vpack.c.b16 %v722, %v721
    %v726 = vpack.c.b16 %v724, %v723
    %v730 = vsel %vm172, %v710, 0
    %v733 = vsel %vm172, %v712, 0
    %v736 = vsel %vm172, %v714, 0
    %v739 = vsel %vm172, %v716, 0
    %741 = vmatprep.subr.bf16.mxu0 0
    %742 = vmatpush1.bf16.msra.mxu0 0
    %743 = vmatprep.subr.bf16.mxu0 0
    %744 = vmatpush1.bf16.msra.mxu0 0
    %745 = vmatprep.subr.bf16.mxu0 0
    %746 = vmatpush1.bf16.msra.mxu0 0
    %747 = vmatprep.subr.bf16.mxu0 0
    %748 = vmatpush1.bf16.msra.mxu0 0
    %749 = vmatprep.subr.bf16.mxu0 0
    %750 = vmatpush1.bf16.msra.mxu0 0
    %751 = vmatprep.subr.bf16.mxu0 0
    %752 = vmatpush1.bf16.msra.mxu0 0
    %753 = vmatprep.subr.bf16.mxu0 0
    %754 = vmatpush1.bf16.msra.mxu0 %v726
    %755 = vmatprep.subr.bf16.mxu0 0
    %756 = vmatpush1.bf16.msra.mxu0 %v725
    %757 = vmatprep.subr.bf16.mxu0 0
    %758 = vmatpush2.bf16.msra.mxu0 0
    %759 = vmatprep.subr.bf16.mxu0 0
    %760 = vmatpush2.bf16.msra.mxu0 0
    %761 = vmatprep.subr.bf16.mxu0 0
    %762 = vmatpush2.bf16.msra.mxu0 0
    %763 = vmatprep.subr.bf16.mxu0 0
    %764 = vmatpush2.bf16.msra.mxu0 0
    %765 = vmatprep.subr.bf16.mxu0 0
    %766 = vmatpush2.bf16.msra.mxu0 0
    %767 = vmatprep.subr.bf16.mxu0 0
    %768 = vmatpush2.bf16.msra.mxu0 0
    %769 = vmatprep.subr.bf16.mxu0 0
    %770 = vmatpush2.bf16.msra.mxu0 0
    %771 = vmatprep.subr.bf16.mxu0 0
    %772 = vmatpush2.bf16.msra.mxu0 0
    %773 = vmatprep.mubr.bf16.mxu0 0
    %774 = vmatmul.mubr.bf16.gmra.mxu0 %v730
    %v775 = vpop.f32.mrf.mxu0
    %v776 = vadd.f32 0.0, %v775
    %v777 = vpop.f32.mrf.mxu0
    %v778 = vpop.f32.mrf.mxu0
    %v779 = vadd.f32 0.0, %v778
    %v780 = vpop.f32.mrf.mxu0
    %781 = vmatprep.mubr.bf16.mxu0 0
    %782 = vmatmul.mubr.bf16.gmra.mxu0 %v733
    %v783 = vpop.f32.mrf.mxu0
    %v784 = vadd.f32 0.0, %v783
    %v785 = vpop.f32.mrf.mxu0
    %v786 = vpop.f32.mrf.mxu0
    %v787 = vadd.f32 0.0, %v786
    %v788 = vpop.f32.mrf.mxu0
    %789 = vmatprep.mubr.bf16.mxu0 0
    %790 = vmatmul.mubr.bf16.gmra.mxu0 %v736
    %v791 = vpop.f32.mrf.mxu0
    %v792 = vadd.f32 0.0, %v791
    %v793 = vpop.f32.mrf.mxu0
    %v794 = vpop.f32.mrf.mxu0
    %v795 = vadd.f32 0.0, %v794
    %v796 = vpop.f32.mrf.mxu0
    %797 = vmatprep.mubr.bf16.mxu0 0
    %798 = vmatmul.mubr.bf16.gmra.mxu0 %v739
    %v799 = vpop.f32.mrf.mxu0
    %v800 = vadd.f32 0.0, %v799
    %v801 = vpop.f32.mrf.mxu0
    %v802 = vpop.f32.mrf.mxu0
    %v803 = vadd.f32 0.0, %v802
    %v804 = vpop.f32.mrf.mxu0
    %805 = vdwg.mxu0
    %v806 = vadd.f32 %v667, %v776
    %v807 = vadd.f32 %v670, %v779
    %v808 = vadd.f32 %v675, %v784
    %v809 = vadd.f32 %v678, %v787
    %v810 = vadd.f32 %v683, %v792
    %v811 = vadd.f32 %v686, %v795
    %v812 = vadd.f32 %v691, %v800
    %v813 = vadd.f32 %v694, %v803
    %v814 = vld [vmem:[%s15 + $0x1] sm:$0x1]
    %v815 = vlaneseq
    %v816 = vshrl.u32 %v815, 7
    %v817 = vsub.s32 0, %v816
    %v818 = vrot.slane %v814, %v817
    %820 = vrot.lane.b32.xlu0 %v818, 32
    %v821 = vpop.permute.xlu0 %820
    %v823 = vadd.f32 %v667, %v821
    %v824 = vadd.f32 %v670, %v821
    %v825 = vadd.f32 %v675, %v821
    %v826 = vadd.f32 %v678, %v821
    %v827 = vadd.f32 %v683, %v821
    %v828 = vadd.f32 %v686, %v821
    %v829 = vadd.f32 %v691, %v821
    %v830 = vadd.f32 %v694, %v821
    %v831 = vadd.f32 %v806, %v430
    %v832 = vadd.f32 %v807, %v433
    %v833 = vadd.f32 %v808, %v438
    %v834 = vadd.f32 %v809, %v441
    %v835 = vadd.f32 %v810, %v446
    %v836 = vadd.f32 %v811, %v449
    %v837 = vadd.f32 %v812, %v454
    %v838 = vadd.f32 %v813, %v457
    %v839 = vmax.f32 %v831, 0.0
    %v840 = vmax.f32 %v832, 0.0
    %v841 = vmax.f32 %v833, 0.0
    %v842 = vmax.f32 %v834, 0.0
    %v843 = vmax.f32 %v835, 0.0
    %v844 = vmax.f32 %v836, 0.0
    %v845 = vmax.f32 %v837, 0.0
    %v846 = vmax.f32 %v838, 0.0
    %v847 = vpack.c.bf16 %v840, %v839
    %v848 = vpack.c.bf16 %v842, %v841
    %v849 = vpack.c.bf16 %v844, %v843
    %v850 = vpack.c.bf16 %v846, %v845
    %v851 = vld [vmem:[%s9] sm:$0xf]
    %v852 = vld [vmem:[%s9 + $0x4] sm:$0xf]
    %v853 = vld [vmem:[%s9 + $0x8] sm:$0xf]
    %v854 = vld [vmem:[%s9 + $0xc] sm:$0xf]
    %v855 = vld [vmem:[%s10] sm:$0x1]
    %v856 = vlaneseq
    %v857 = vshrl.u32 %v856, 7
    %v858 = vsub.s32 0, %v857
    %v859 = vrot.slane %v855, %v858
    %v864 = vunpack.c.l.b16 %v851
    %v865 = vunpack.c.l.b16 %v852
    %v866 = vunpack.c.l.b16 %v853
    %v867 = vunpack.c.l.b16 %v854
    %v868 = vpack.c.b16 %v865, %v864
    %v869 = vpack.c.b16 %v867, %v866
    %v873 = vsel %vm172, %v847, 0
    %v876 = vsel %vm172, %v848, 0
    %v879 = vsel %vm172, %v849, 0
    %v882 = vsel %vm172, %v850, 0
    %884 = vmatprep.subr.bf16.mxu0 0
    %885 = vmatpush1.bf16.msra.mxu0 0
    %886 = vmatprep.subr.bf16.mxu0 0
    %887 = vmatpush1.bf16.msra.mxu0 0
    %888 = vmatprep.subr.bf16.mxu0 0
    %889 = vmatpush1.bf16.msra.mxu0 0
    %890 = vmatprep.subr.bf16.mxu0 0
    %891 = vmatpush1.bf16.msra.mxu0 0
    %892 = vmatprep.subr.bf16.mxu0 0
    %893 = vmatpush1.bf16.msra.mxu0 0
    %894 = vmatprep.subr.bf16.mxu0 0
    %895 = vmatpush1.bf16.msra.mxu0 0
    %896 = vmatprep.subr.bf16.mxu0 0
    %897 = vmatpush1.bf16.msra.mxu0 %v869
    %898 = vmatprep.subr.bf16.mxu0 0
    %899 = vmatpush1.bf16.msra.mxu0 %v868
    %900 = vmatprep.subr.bf16.mxu0 0
    %901 = vmatpush2.bf16.msra.mxu0 0
    %902 = vmatprep.subr.bf16.mxu0 0
    %903 = vmatpush2.bf16.msra.mxu0 0
    %904 = vmatprep.subr.bf16.mxu0 0
    %905 = vmatpush2.bf16.msra.mxu0 0
    %906 = vmatprep.subr.bf16.mxu0 0
    %907 = vmatpush2.bf16.msra.mxu0 0
    %908 = vmatprep.subr.bf16.mxu0 0
    %909 = vmatpush2.bf16.msra.mxu0 0
    %910 = vmatprep.subr.bf16.mxu0 0
    %911 = vmatpush2.bf16.msra.mxu0 0
    %912 = vmatprep.subr.bf16.mxu0 0
    %913 = vmatpush2.bf16.msra.mxu0 0
    %914 = vmatprep.subr.bf16.mxu0 0
    %915 = vmatpush2.bf16.msra.mxu0 0
    %916 = vmatprep.mubr.bf16.mxu0 0
    %917 = vmatmul.mubr.bf16.gmra.mxu0 %v873
    %v918 = vpop.f32.mrf.mxu0
    %v919 = vadd.f32 %v859, %v918
    %v920 = vpop.f32.mrf.mxu0
    %v921 = vpop.f32.mrf.mxu0
    %v922 = vadd.f32 %v859, %v921
    %v923 = vpop.f32.mrf.mxu0
    %924 = vmatprep.mubr.bf16.mxu0 0
    %925 = vmatmul.mubr.bf16.gmra.mxu0 %v876
    %v926 = vpop.f32.mrf.mxu0
    %v927 = vadd.f32 %v859, %v926
    %v928 = vpop.f32.mrf.mxu0
    %v929 = vpop.f32.mrf.mxu0
    %v930 = vadd.f32 %v859, %v929
    %v931 = vpop.f32.mrf.mxu0
    %932 = vmatprep.mubr.bf16.mxu0 0
    %933 = vmatmul.mubr.bf16.gmra.mxu0 %v879
    %v934 = vpop.f32.mrf.mxu0
    %v935 = vadd.f32 %v859, %v934
    %v936 = vpop.f32.mrf.mxu0
    %v937 = vpop.f32.mrf.mxu0
    %v938 = vadd.f32 %v859, %v937
    %v939 = vpop.f32.mrf.mxu0
    %940 = vmatprep.mubr.bf16.mxu0 0
    %941 = vmatmul.mubr.bf16.gmra.mxu0 %v882
    %v942 = vpop.f32.mrf.mxu0
    %v943 = vadd.f32 %v859, %v942
    %v944 = vpop.f32.mrf.mxu0
    %v945 = vpop.f32.mrf.mxu0
    %v946 = vadd.f32 %v859, %v945
    %v947 = vpop.f32.mrf.mxu0
    %948 = vdwg.mxu0
    %v949 = vmax.f32 %v919, 0.0
    %v950 = vmax.f32 %v922, 0.0
    %v951 = vmax.f32 %v927, 0.0
    %v952 = vmax.f32 %v930, 0.0
    %v953 = vmax.f32 %v935, 0.0
    %v954 = vmax.f32 %v938, 0.0
    %v955 = vmax.f32 %v943, 0.0
    %v956 = vmax.f32 %v946, 0.0
    %v957 = vld [vmem:[%s10 + $0x1] sm:$0x1]
    %v958 = vlaneseq
    %v959 = vshrl.u32 %v958, 7
    %v960 = vsub.s32 0, %v959
    %v961 = vrot.slane %v957, %v960
    %v962 = vmul.f32 %v949, %v961
    %v963 = vmul.f32 %v950, %v961
    %v964 = vmul.f32 %v951, %v961
    %v965 = vmul.f32 %v952, %v961
    %v966 = vmul.f32 %v953, %v961
    %v967 = vmul.f32 %v954, %v961
    %v968 = vmul.f32 %v955, %v961
    %v969 = vmul.f32 %v956, %v961
    %v970 = vld [vmem:[%s10 + $0x2] sm:$0x1]
    %v971 = vlaneseq
    %v972 = vshrl.u32 %v971, 7
    %v973 = vsub.s32 0, %v972
    %v974 = vrot.slane %v970, %v973
    %v975 = vadd.f32 %v962, %v974
    %v976 = vadd.f32 %v963, %v974
    %v977 = vadd.f32 %v964, %v974
    %v978 = vadd.f32 %v965, %v974
    %v979 = vadd.f32 %v966, %v974
    %v980 = vadd.f32 %v967, %v974
    %v981 = vadd.f32 %v968, %v974
    %v982 = vadd.f32 %v969, %v974
    %983 = vset.pattern.permute.xlu0 0
    %984 = vperm.xlu0 %983, %v94
    %v985 = vpop.permute.xlu0 %984
    %987 = vset.pattern.permute.xlu0 0
    %988 = vperm.xlu0 %987, %v95
    %v989 = vpop.permute.xlu0 %988
    %991 = vset.pattern.permute.xlu0 0
    %992 = vperm.xlu0 %991, %v96
    %v993 = vpop.permute.xlu0 %992
    %995 = vset.pattern.permute.xlu0 0
    %996 = vperm.xlu0 %995, %v97
    %v997 = vpop.permute.xlu0 %996
    %999 = vset.pattern.permute.xlu0 0
    %1000 = vperm.xlu0 %999, %v98
    %v1001 = vpop.permute.xlu0 %1000
    %1003 = vset.pattern.permute.xlu0 0
    %1004 = vperm.xlu0 %1003, %v99
    %v1005 = vpop.permute.xlu0 %1004
    %1007 = vset.pattern.permute.xlu0 0
    %1008 = vperm.xlu0 %1007, %v100
    %v1009 = vpop.permute.xlu0 %1008
    %1011 = vset.pattern.permute.xlu0 0
    %1012 = vperm.xlu0 %1011, %v101
    %v1013 = vpop.permute.xlu0 %1012
    %v1015 = vmul.f32 %v985, %v975
    %v1016 = vmul.f32 %v989, %v976
    %v1017 = vmul.f32 %v993, %v977
    %v1018 = vmul.f32 %v997, %v978
    %v1019 = vmul.f32 %v1001, %v979
    %v1020 = vmul.f32 %v1005, %v980
    %v1021 = vmul.f32 %v1009, %v981
    %v1022 = vmul.f32 %v1013, %v982
    %1031 = vrot.lane.b32.xlu0 %v1015, 32
    %v1032 = vpop.permute.xlu0 %1031
    %1033 = vrot.lane.b32.xlu0 %v1016, 32
    %v1034 = vpop.permute.xlu0 %1033
    %1035 = vrot.lane.b32.xlu0 %v1017, 32
    %v1036 = vpop.permute.xlu0 %1035
    %1037 = vrot.lane.b32.xlu0 %v1018, 32
    %v1038 = vpop.permute.xlu0 %1037
    %1039 = vrot.lane.b32.xlu0 %v1019, 32
    %v1040 = vpop.permute.xlu0 %1039
    %1041 = vrot.lane.b32.xlu0 %v1020, 32
    %v1042 = vpop.permute.xlu0 %1041
    %1043 = vrot.lane.b32.xlu0 %v1021, 32
    %v1044 = vpop.permute.xlu0 %1043
    %1045 = vrot.lane.b32.xlu0 %v1022, 32
    %v1046 = vpop.permute.xlu0 %1045
    %v1055 = vsel %vm556, %v430, %v1032
    %v1056 = vsel %vm557, %v433, %v1034
    %v1057 = vsel %vm558, %v438, %v1036
    %v1058 = vsel %vm559, %v441, %v1038
    %v1059 = vsel %vm560, %v446, %v1040
    %v1060 = vsel %vm561, %v449, %v1042
    %v1061 = vsel %vm562, %v454, %v1044
    %v1062 = vsel %vm563, %v457, %v1046
    %v1063 = vpack.c.bf16 %v1056, %v1055
    %v1064 = vpack.c.bf16 %v1058, %v1057
    %v1065 = vpack.c.bf16 %v1060, %v1059
    %v1066 = vpack.c.bf16 %v1062, %v1061
    %v1067 = vld [vmem:[%s11] sm:$0xf]
    %v1068 = vld [vmem:[%s11 + $0x4] sm:$0xf]
    %v1069 = vld [vmem:[%s11 + $0x8] sm:$0xf]
    %v1070 = vld [vmem:[%s11 + $0xc] sm:$0xf]
    %v1071 = vld [vmem:[%s12] sm:$0x1]
    %v1073 = vlaneseq
    %v1074 = vshrl.u32 %v1073, 7
    %v1075 = vsub.s32 0, %v1074
    %v1076 = vrot.slane %v1071, %v1075
    %1082 = vrot.lane.b32.xlu0 %v1063, 96
    %v1083 = vpop.permute.xlu0 %1082
    %1084 = vrot.lane.b32.xlu0 %v1064, 96
    %v1085 = vpop.permute.xlu0 %1084
    %1086 = vrot.lane.b32.xlu0 %v1065, 96
    %v1087 = vpop.permute.xlu0 %1086
    %1088 = vrot.lane.b32.xlu0 %v1066, 96
    %v1089 = vpop.permute.xlu0 %1088
    %v1094 = vunpack.c.l.b16 %v1067
    %v1095 = vunpack.c.l.b16 %v1068
    %v1096 = vunpack.c.l.b16 %v1069
    %v1097 = vunpack.c.l.b16 %v1070
    %v1098 = vpack.c.b16 %v1095, %v1094
    %v1099 = vpack.c.b16 %v1097, %v1096
    %v1103 = vsel %vm172, %v1083, 0
    %v1106 = vsel %vm172, %v1085, 0
    %v1109 = vsel %vm172, %v1087, 0
    %v1112 = vsel %vm172, %v1089, 0
    %1114 = vmatprep.subr.bf16.mxu0 0
    %1115 = vmatpush1.bf16.msra.mxu0 0
    %1116 = vmatprep.subr.bf16.mxu0 0
    %1117 = vmatpush1.bf16.msra.mxu0 0
    %1118 = vmatprep.subr.bf16.mxu0 0
    %1119 = vmatpush1.bf16.msra.mxu0 0
    %1120 = vmatprep.subr.bf16.mxu0 0
    %1121 = vmatpush1.bf16.msra.mxu0 0
    %1122 = vmatprep.subr.bf16.mxu0 0
    %1123 = vmatpush1.bf16.msra.mxu0 0
    %1124 = vmatprep.subr.bf16.mxu0 0
    %1125 = vmatpush1.bf16.msra.mxu0 0
    %1126 = vmatprep.subr.bf16.mxu0 0
    %1127 = vmatpush1.bf16.msra.mxu0 %v1099
    %1128 = vmatprep.subr.bf16.mxu0 0
    %1129 = vmatpush1.bf16.msra.mxu0 %v1098
    %1130 = vmatprep.subr.bf16.mxu0 0
    %1131 = vmatpush2.bf16.msra.mxu0 0
    %1132 = vmatprep.subr.bf16.mxu0 0
    %1133 = vmatpush2.bf16.msra.mxu0 0
    %1134 = vmatprep.subr.bf16.mxu0 0
    %1135 = vmatpush2.bf16.msra.mxu0 0
    %1136 = vmatprep.subr.bf16.mxu0 0
    %1137 = vmatpush2.bf16.msra.mxu0 0
    %1138 = vmatprep.subr.bf16.mxu0 0
    %1139 = vmatpush2.bf16.msra.mxu0 0
    %1140 = vmatprep.subr.bf16.mxu0 0
    %1141 = vmatpush2.bf16.msra.mxu0 0
    %1142 = vmatprep.subr.bf16.mxu0 0
    %1143 = vmatpush2.bf16.msra.mxu0 0
    %1144 = vmatprep.subr.bf16.mxu0 0
    %1145 = vmatpush2.bf16.msra.mxu0 0
    %1146 = vmatprep.mubr.bf16.mxu0 0
    %1147 = vmatmul.mubr.bf16.gmra.mxu0 %v1103
    %v1148 = vpop.f32.mrf.mxu0
    %v1149 = vadd.f32 %v1076, %v1148
    %v1150 = vpop.f32.mrf.mxu0
    %v1151 = vpop.f32.mrf.mxu0
    %v1152 = vadd.f32 %v1076, %v1151
    %v1153 = vpop.f32.mrf.mxu0
    %1154 = vmatprep.mubr.bf16.mxu0 0
    %1155 = vmatmul.mubr.bf16.gmra.mxu0 %v1106
    %v1156 = vpop.f32.mrf.mxu0
    %v1157 = vadd.f32 %v1076, %v1156
    %v1158 = vpop.f32.mrf.mxu0
    %v1159 = vpop.f32.mrf.mxu0
    %v1160 = vadd.f32 %v1076, %v1159
    %v1161 = vpop.f32.mrf.mxu0
    %1162 = vmatprep.mubr.bf16.mxu0 0
    %1163 = vmatmul.mubr.bf16.gmra.mxu0 %v1109
    %v1164 = vpop.f32.mrf.mxu0
    %v1165 = vadd.f32 %v1076, %v1164
    %v1166 = vpop.f32.mrf.mxu0
    %v1167 = vpop.f32.mrf.mxu0
    %v1168 = vadd.f32 %v1076, %v1167
    %v1169 = vpop.f32.mrf.mxu0
    %1170 = vmatprep.mubr.bf16.mxu0 0
    %1171 = vmatmul.mubr.bf16.gmra.mxu0 %v1112
    %v1172 = vpop.f32.mrf.mxu0
    %v1173 = vadd.f32 %v1076, %v1172
    %v1174 = vpop.f32.mrf.mxu0
    %v1175 = vpop.f32.mrf.mxu0
    %v1176 = vadd.f32 %v1076, %v1175
    %v1177 = vpop.f32.mrf.mxu0
    %1178 = vdwg.mxu0
    %v1179 = vxor.u32 %v1149, 2147483648
    %v1180 = vxor.u32 %v1152, 2147483648
    %v1181 = vxor.u32 %v1157, 2147483648
    %v1182 = vxor.u32 %v1160, 2147483648
    %v1183 = vxor.u32 %v1165, 2147483648
    %v1184 = vxor.u32 %v1168, 2147483648
    %v1185 = vxor.u32 %v1173, 2147483648
    %v1186 = vxor.u32 %v1176, 2147483648
    %v1187 = vmul.f32 %v1179, 1.442695
    %v1188 = vpow.pop %v1187
    %v1189 = vmul.f32 %v1180, 1.442695
    %v1190 = vpow.pop %v1189
    %v1191 = vmul.f32 %v1181, 1.442695
    %v1192 = vpow.pop %v1191
    %v1193 = vmul.f32 %v1182, 1.442695
    %v1194 = vpow.pop %v1193
    %v1195 = vmul.f32 %v1183, 1.442695
    %v1196 = vpow.pop %v1195
    %v1197 = vmul.f32 %v1184, 1.442695
    %v1198 = vpow.pop %v1197
    %v1199 = vmul.f32 %v1185, 1.442695
    %v1200 = vpow.pop %v1199
    %v1201 = vmul.f32 %v1186, 1.442695
    %v1202 = vpow.pop %v1201
    %v1203 = vadd.f32 %v1188, 1.0
    %v1204 = vadd.f32 %v1190, 1.0
    %v1205 = vadd.f32 %v1192, 1.0
    %v1206 = vadd.f32 %v1194, 1.0
    %v1207 = vadd.f32 %v1196, 1.0
    %v1208 = vadd.f32 %v1198, 1.0
    %v1209 = vadd.f32 %v1200, 1.0
    %v1210 = vadd.f32 %v1202, 1.0
    %v1211 = vrcp.pop %v1203
    %v1212 = vmul.f32 1.0, %v1211
    %v1213 = vrcp.pop %v1204
    %v1214 = vmul.f32 1.0, %v1213
    %v1215 = vrcp.pop %v1205
    %v1216 = vmul.f32 1.0, %v1215
    %v1217 = vrcp.pop %v1206
    %v1218 = vmul.f32 1.0, %v1217
    %v1219 = vrcp.pop %v1207
    %v1220 = vmul.f32 1.0, %v1219
    %v1221 = vrcp.pop %v1208
    %v1222 = vmul.f32 1.0, %v1221
    %v1223 = vrcp.pop %v1209
    %v1224 = vmul.f32 1.0, %v1223
    %v1225 = vrcp.pop %v1210
    %v1226 = vmul.f32 1.0, %v1225
    %v1227 = vtanh.pop %v1149
    %v1228 = vtanh.pop %v1152
    %v1229 = vtanh.pop %v1157
    %v1230 = vtanh.pop %v1160
    %v1231 = vtanh.pop %v1165
    %v1232 = vtanh.pop %v1168
    %v1233 = vtanh.pop %v1173
    %v1234 = vtanh.pop %v1176
    %v1235 = vld [vmem:[%s13] sm:$0xff]
    %v1236 = vld [vmem:[%s13 + $0x8] sm:$0xff]
    %v1237 = vld [vmem:[%s13 + $0x10] sm:$0xff]
    %v1238 = vld [vmem:[%s13 + $0x18] sm:$0xff]
    %v1239 = vld [vmem:[%s13 + $0x20] sm:$0xff]
    %v1240 = vld [vmem:[%s13 + $0x28] sm:$0xff]
    %v1241 = vld [vmem:[%s13 + $0x30] sm:$0xff]
    %v1242 = vld [vmem:[%s13 + $0x38] sm:$0xff]
    %1244 = vset.pattern.permute.xlu0 0
    %1245 = vperm.xlu0 %1244, %v1235
    %v1246 = vpop.permute.xlu0 %1245
    %1249 = vset.pattern.permute.xlu0 0
    %1250 = vperm.xlu0 %1249, %v1236
    %v1251 = vpop.permute.xlu0 %1250
    %1254 = vset.pattern.permute.xlu0 0
    %1255 = vperm.xlu0 %1254, %v1237
    %v1256 = vpop.permute.xlu0 %1255
    %1259 = vset.pattern.permute.xlu0 0
    %1260 = vperm.xlu0 %1259, %v1238
    %v1261 = vpop.permute.xlu0 %1260
    %1264 = vset.pattern.permute.xlu0 0
    %1265 = vperm.xlu0 %1264, %v1239
    %v1266 = vpop.permute.xlu0 %1265
    %1269 = vset.pattern.permute.xlu0 0
    %1270 = vperm.xlu0 %1269, %v1240
    %v1271 = vpop.permute.xlu0 %1270
    %1274 = vset.pattern.permute.xlu0 0
    %1275 = vperm.xlu0 %1274, %v1241
    %v1276 = vpop.permute.xlu0 %1275
    %1279 = vset.pattern.permute.xlu0 0
    %1280 = vperm.xlu0 %1279, %v1242
    %v1281 = vpop.permute.xlu0 %1280
    %v1283 = vmul.f32 %v1246, %v1212
    %v1284 = vmul.f32 %v1251, %v1214
    %v1285 = vmul.f32 %v1256, %v1216
    %v1286 = vmul.f32 %v1261, %v1218
    %v1287 = vmul.f32 %v1266, %v1220
    %v1288 = vmul.f32 %v1271, %v1222
    %v1289 = vmul.f32 %v1276, %v1224
    %v1290 = vmul.f32 %v1281, %v1226
    %1299 = vrot.lane.b32.xlu0 %v1055, 96
    %v1300 = vpop.permute.xlu0 %1299
    %1301 = vrot.lane.b32.xlu0 %v1056, 96
    %v1302 = vpop.permute.xlu0 %1301
    %1303 = vrot.lane.b32.xlu0 %v1057, 96
    %v1304 = vpop.permute.xlu0 %1303
    %1305 = vrot.lane.b32.xlu0 %v1058, 96
    %v1306 = vpop.permute.xlu0 %1305
    %1307 = vrot.lane.b32.xlu0 %v1059, 96
    %v1308 = vpop.permute.xlu0 %1307
    %1309 = vrot.lane.b32.xlu0 %v1060, 96
    %v1310 = vpop.permute.xlu0 %1309
    %1311 = vrot.lane.b32.xlu0 %v1061, 96
    %v1312 = vpop.permute.xlu0 %1311
    %1313 = vrot.lane.b32.xlu0 %v1062, 96
    %v1314 = vpop.permute.xlu0 %1313
    %v1323 = vmul.f32 %v1283, %v1300
    %v1324 = vmul.f32 %v1284, %v1302
    %v1325 = vmul.f32 %v1285, %v1304
    %v1326 = vmul.f32 %v1286, %v1306
    %v1327 = vmul.f32 %v1287, %v1308
    %v1328 = vmul.f32 %v1288, %v1310
    %v1329 = vmul.f32 %v1289, %v1312
    %v1330 = vmul.f32 %v1290, %v1314
    %1339 = vrot.lane.b32.xlu0 %v1323, 32
    %v1340 = vpop.permute.xlu0 %1339
    %1341 = vrot.lane.b32.xlu0 %v1324, 32
    %v1342 = vpop.permute.xlu0 %1341
    %1343 = vrot.lane.b32.xlu0 %v1325, 32
    %v1344 = vpop.permute.xlu0 %1343
    %1345 = vrot.lane.b32.xlu0 %v1326, 32
    %v1346 = vpop.permute.xlu0 %1345
    %1347 = vrot.lane.b32.xlu0 %v1327, 32
    %v1348 = vpop.permute.xlu0 %1347
    %1349 = vrot.lane.b32.xlu0 %v1328, 32
    %v1350 = vpop.permute.xlu0 %1349
    %1351 = vrot.lane.b32.xlu0 %v1329, 32
    %v1352 = vpop.permute.xlu0 %1351
    %1353 = vrot.lane.b32.xlu0 %v1330, 32
    %v1354 = vpop.permute.xlu0 %1353
    %v1363 = vsub.f32 %v1055, %v1340
    %v1364 = vsub.f32 %v1056, %v1342
    %v1365 = vsub.f32 %v1057, %v1344
    %v1366 = vsub.f32 %v1058, %v1346
    %v1367 = vsub.f32 %v1059, %v1348
    %v1368 = vsub.f32 %v1060, %v1350
    %v1369 = vsub.f32 %v1061, %v1352
    %v1370 = vsub.f32 %v1062, %v1354
    %v1371 = vmul.f32 %v1246, %v1227
    %v1372 = vmul.f32 %v1251, %v1228
    %v1373 = vmul.f32 %v1256, %v1229
    %v1374 = vmul.f32 %v1261, %v1230
    %v1375 = vmul.f32 %v1266, %v1231
    %v1376 = vmul.f32 %v1271, %v1232
    %v1377 = vmul.f32 %v1276, %v1233
    %v1378 = vmul.f32 %v1281, %v1234
    %v1379 = vadd.f32 %v1363, %v1371
    %v1380 = vadd.f32 %v1364, %v1372
    %v1381 = vadd.f32 %v1365, %v1373
    %v1382 = vadd.f32 %v1366, %v1374
    %v1383 = vadd.f32 %v1367, %v1375
    %v1384 = vadd.f32 %v1368, %v1376
    %v1385 = vadd.f32 %v1369, %v1377
    %v1386 = vadd.f32 %v1370, %v1378
    %v1387 = vpack.c.bf16 %v1380, %v1379
    %v1388 = vpack.c.bf16 %v1382, %v1381
    %v1389 = vpack.c.bf16 %v1384, %v1383
    %v1390 = vpack.c.bf16 %v1386, %v1385
    %v1391 = vld [vmem:[%s14] sm:$0xf]
    %v1392 = vld [vmem:[%s14 + $0x4] sm:$0xf]
    %v1393 = vld [vmem:[%s14 + $0x8] sm:$0xf]
    %v1394 = vld [vmem:[%s14 + $0xc] sm:$0xf]
    %v1395 = vld [vmem:[%s15] sm:$0x1]
    %v1396 = vlaneseq
    %v1397 = vshrl.u32 %v1396, 7
    %v1398 = vsub.s32 0, %v1397
    %v1399 = vrot.slane %v1395, %v1398
    %1404 = vrot.lane.b32.xlu0 %v1387, 96
    %v1405 = vpop.permute.xlu0 %1404
    %1406 = vrot.lane.b32.xlu0 %v1388, 96
    %v1407 = vpop.permute.xlu0 %1406
    %1408 = vrot.lane.b32.xlu0 %v1389, 96
    %v1409 = vpop.permute.xlu0 %1408
    %1410 = vrot.lane.b32.xlu0 %v1390, 96
    %v1411 = vpop.permute.xlu0 %1410
    %v1416 = vunpack.c.l.b16 %v1391
    %v1417 = vunpack.c.l.b16 %v1392
    %v1418 = vunpack.c.l.b16 %v1393
    %v1419 = vunpack.c.l.b16 %v1394
    %v1420 = vpack.c.b16 %v1417, %v1416
    %v1421 = vpack.c.b16 %v1419, %v1418
    %v1425 = vsel %vm172, %v1405, 0
    %v1428 = vsel %vm172, %v1407, 0
    %v1431 = vsel %vm172, %v1409, 0
    %v1434 = vsel %vm172, %v1411, 0
    %1436 = vmatprep.subr.bf16.mxu0 0
    %1437 = vmatpush1.bf16.msra.mxu0 0
    %1438 = vmatprep.subr.bf16.mxu0 0
    %1439 = vmatpush1.bf16.msra.mxu0 0
    %1440 = vmatprep.subr.bf16.mxu0 0
    %1441 = vmatpush1.bf16.msra.mxu0 0
    %1442 = vmatprep.subr.bf16.mxu0 0
    %1443 = vmatpush1.bf16.msra.mxu0 0
    %1444 = vmatprep.subr.bf16.mxu0 0
    %1445 = vmatpush1.bf16.msra.mxu0 0
    %1446 = vmatprep.subr.bf16.mxu0 0
    %1447 = vmatpush1.bf16.msra.mxu0 0
    %1448 = vmatprep.subr.bf16.mxu0 0
    %1449 = vmatpush1.bf16.msra.mxu0 %v1421
    %1450 = vmatprep.subr.bf16.mxu0 0
    %1451 = vmatpush1.bf16.msra.mxu0 %v1420
    %1452 = vmatprep.subr.bf16.mxu0 0
    %1453 = vmatpush2.bf16.msra.mxu0 0
    %1454 = vmatprep.subr.bf16.mxu0 0
    %1455 = vmatpush2.bf16.msra.mxu0 0
    %1456 = vmatprep.subr.bf16.mxu0 0
    %1457 = vmatpush2.bf16.msra.mxu0 0
    %1458 = vmatprep.subr.bf16.mxu0 0
    %1459 = vmatpush2.bf16.msra.mxu0 0
    %1460 = vmatprep.subr.bf16.mxu0 0
    %1461 = vmatpush2.bf16.msra.mxu0 0
    %1462 = vmatprep.subr.bf16.mxu0 0
    %1463 = vmatpush2.bf16.msra.mxu0 0
    %1464 = vmatprep.subr.bf16.mxu0 0
    %1465 = vmatpush2.bf16.msra.mxu0 0
    %1466 = vmatprep.subr.bf16.mxu0 0
    %1467 = vmatpush2.bf16.msra.mxu0 0
    %1468 = vmatprep.mubr.bf16.mxu0 0
    %1469 = vmatmul.mubr.bf16.gmra.mxu0 %v1425
    %v1470 = vpop.f32.mrf.mxu0
    %v1471 = vadd.f32 %v1399, %v1470
    %v1472 = vpop.f32.mrf.mxu0
    %v1473 = vpop.f32.mrf.mxu0
    %v1474 = vadd.f32 %v1399, %v1473
    %v1475 = vpop.f32.mrf.mxu0
    %1476 = vmatprep.mubr.bf16.mxu0 0
    %1477 = vmatmul.mubr.bf16.gmra.mxu0 %v1428
    %v1478 = vpop.f32.mrf.mxu0
    %v1479 = vadd.f32 %v1399, %v1478
    %v1480 = vpop.f32.mrf.mxu0
    %v1481 = vpop.f32.mrf.mxu0
    %v1482 = vadd.f32 %v1399, %v1481
    %v1483 = vpop.f32.mrf.mxu0
    %1484 = vmatprep.mubr.bf16.mxu0 0
    %1485 = vmatmul.mubr.bf16.gmra.mxu0 %v1431
    %v1486 = vpop.f32.mrf.mxu0
    %v1487 = vadd.f32 %v1399, %v1486
    %v1488 = vpop.f32.mrf.mxu0
    %v1489 = vpop.f32.mrf.mxu0
    %v1490 = vadd.f32 %v1399, %v1489
    %v1491 = vpop.f32.mrf.mxu0
    %1492 = vmatprep.mubr.bf16.mxu0 0
    %1493 = vmatmul.mubr.bf16.gmra.mxu0 %v1434
    %v1494 = vpop.f32.mrf.mxu0
    %v1495 = vadd.f32 %v1399, %v1494
    %v1496 = vpop.f32.mrf.mxu0
    %v1497 = vpop.f32.mrf.mxu0
    %v1498 = vadd.f32 %v1399, %v1497
    %v1499 = vpop.f32.mrf.mxu0
    %1500 = vdwg.mxu0
    %1509 = vrot.lane.b32.xlu0 %v823, 96
    %v1510 = vpop.permute.xlu0 %1509
    %1511 = vrot.lane.b32.xlu0 %v824, 96
    %v1512 = vpop.permute.xlu0 %1511
    %1513 = vrot.lane.b32.xlu0 %v825, 96
    %v1514 = vpop.permute.xlu0 %1513
    %1515 = vrot.lane.b32.xlu0 %v826, 96
    %v1516 = vpop.permute.xlu0 %1515
    %1517 = vrot.lane.b32.xlu0 %v827, 96
    %v1518 = vpop.permute.xlu0 %1517
    %1519 = vrot.lane.b32.xlu0 %v828, 96
    %v1520 = vpop.permute.xlu0 %1519
    %1521 = vrot.lane.b32.xlu0 %v829, 96
    %v1522 = vpop.permute.xlu0 %1521
    %1523 = vrot.lane.b32.xlu0 %v830, 96
    %v1524 = vpop.permute.xlu0 %1523
    %v1533 = vadd.f32 %v1471, %v1510
    %v1534 = vadd.f32 %v1474, %v1512
    %v1535 = vadd.f32 %v1479, %v1514
    %v1536 = vadd.f32 %v1482, %v1516
    %v1537 = vadd.f32 %v1487, %v1518
    %v1538 = vadd.f32 %v1490, %v1520
    %v1539 = vadd.f32 %v1495, %v1522
    %v1540 = vadd.f32 %v1498, %v1524
    %v1541 = vxor.u32 %v1533, 2147483648
    %v1542 = vxor.u32 %v1534, 2147483648
    %v1543 = vxor.u32 %v1535, 2147483648
    %v1544 = vxor.u32 %v1536, 2147483648
    %v1545 = vxor.u32 %v1537, 2147483648
    %v1546 = vxor.u32 %v1538, 2147483648
    %v1547 = vxor.u32 %v1539, 2147483648
    %v1548 = vxor.u32 %v1540, 2147483648
    %v1549 = vmul.f32 %v1541, 1.442695
    %v1550 = vpow.pop %v1549
    %v1551 = vmul.f32 %v1542, 1.442695
    %v1552 = vpow.pop %v1551
    %v1553 = vmul.f32 %v1543, 1.442695
    %v1554 = vpow.pop %v1553
    %v1555 = vmul.f32 %v1544, 1.442695
    %v1556 = vpow.pop %v1555
    %v1557 = vmul.f32 %v1545, 1.442695
    %v1558 = vpow.pop %v1557
    %v1559 = vmul.f32 %v1546, 1.442695
    %v1560 = vpow.pop %v1559
    %v1561 = vmul.f32 %v1547, 1.442695
    %v1562 = vpow.pop %v1561
    %v1563 = vmul.f32 %v1548, 1.442695
    %v1564 = vpow.pop %v1563
    %v1565 = vadd.f32 %v1550, 1.0
    %v1566 = vadd.f32 %v1552, 1.0
    %v1567 = vadd.f32 %v1554, 1.0
    %v1568 = vadd.f32 %v1556, 1.0
    %v1569 = vadd.f32 %v1558, 1.0
    %v1570 = vadd.f32 %v1560, 1.0
    %v1571 = vadd.f32 %v1562, 1.0
    %v1572 = vadd.f32 %v1564, 1.0
    %v1573 = vrcp.pop %v1565
    %v1574 = vmul.f32 1.0, %v1573
    %v1575 = vrcp.pop %v1566
    %v1576 = vmul.f32 1.0, %v1575
    %v1577 = vrcp.pop %v1567
    %v1578 = vmul.f32 1.0, %v1577
    %v1579 = vrcp.pop %v1568
    %v1580 = vmul.f32 1.0, %v1579
    %v1581 = vrcp.pop %v1569
    %v1582 = vmul.f32 1.0, %v1581
    %v1583 = vrcp.pop %v1570
    %v1584 = vmul.f32 1.0, %v1583
    %v1585 = vrcp.pop %v1571
    %v1586 = vmul.f32 1.0, %v1585
    %v1587 = vrcp.pop %v1572
    %v1588 = vmul.f32 1.0, %v1587
    %1589 = vrot.lane.b32.xlu0 %v823, 32
    %v1590 = vpop.permute.xlu0 %1589
    %1591 = vrot.lane.b32.xlu0 %v824, 32
    %v1592 = vpop.permute.xlu0 %1591
    %1593 = vrot.lane.b32.xlu0 %v825, 32
    %v1594 = vpop.permute.xlu0 %1593
    %1595 = vrot.lane.b32.xlu0 %v826, 32
    %v1596 = vpop.permute.xlu0 %1595
    %1597 = vrot.lane.b32.xlu0 %v827, 32
    %v1598 = vpop.permute.xlu0 %1597
    %1599 = vrot.lane.b32.xlu0 %v828, 32
    %v1600 = vpop.permute.xlu0 %1599
    %1601 = vrot.lane.b32.xlu0 %v829, 32
    %v1602 = vpop.permute.xlu0 %1601
    %1603 = vrot.lane.b32.xlu0 %v830, 32
    %v1604 = vpop.permute.xlu0 %1603
    %v1613 = vmul.f32 %v1574, %v1590
    %v1614 = vmul.f32 %v1576, %v1592
    %v1615 = vmul.f32 %v1578, %v1594
    %v1616 = vmul.f32 %v1580, %v1596
    %v1617 = vmul.f32 %v1582, %v1598
    %v1618 = vmul.f32 %v1584, %v1600
    %v1619 = vmul.f32 %v1586, %v1602
    %v1620 = vmul.f32 %v1588, %v1604
    %1629 = vrot.lane.b32.xlu0 %v1613, 64
    %v1630 = vpop.permute.xlu0 %1629
    %1631 = vrot.lane.b32.xlu0 %v1614, 64
    %v1632 = vpop.permute.xlu0 %1631
    %1633 = vrot.lane.b32.xlu0 %v1615, 64
    %v1634 = vpop.permute.xlu0 %1633
    %1635 = vrot.lane.b32.xlu0 %v1616, 64
    %v1636 = vpop.permute.xlu0 %1635
    %1637 = vrot.lane.b32.xlu0 %v1617, 64
    %v1638 = vpop.permute.xlu0 %1637
    %1639 = vrot.lane.b32.xlu0 %v1618, 64
    %v1640 = vpop.permute.xlu0 %1639
    %1641 = vrot.lane.b32.xlu0 %v1619, 64
    %v1642 = vpop.permute.xlu0 %1641
    %1643 = vrot.lane.b32.xlu0 %v1620, 64
    %v1644 = vpop.permute.xlu0 %1643
    %v1653 = vadd.f32 %v1471, %v1630
    %v1654 = vadd.f32 %v1474, %v1632
    %v1655 = vadd.f32 %v1479, %v1634
    %v1656 = vadd.f32 %v1482, %v1636
    %v1657 = vadd.f32 %v1487, %v1638
    %v1658 = vadd.f32 %v1490, %v1640
    %v1659 = vadd.f32 %v1495, %v1642
    %v1660 = vadd.f32 %v1498, %v1644
    %v1661 = vtanh.pop %v1653
    %v1662 = vtanh.pop %v1654
    %v1663 = vtanh.pop %v1655
    %v1664 = vtanh.pop %v1656
    %v1665 = vtanh.pop %v1657
    %v1666 = vtanh.pop %v1658
    %v1667 = vtanh.pop %v1659
    %v1668 = vtanh.pop %v1660
    %v1669 = vsub.f32 1.0, %v1574
    %v1670 = vsub.f32 1.0, %v1576
    %v1671 = vsub.f32 1.0, %v1578
    %v1672 = vsub.f32 1.0, %v1580
    %v1673 = vsub.f32 1.0, %v1582
    %v1674 = vsub.f32 1.0, %v1584
    %v1675 = vsub.f32 1.0, %v1586
    %v1676 = vsub.f32 1.0, %v1588
    %1685 = vrot.lane.b32.xlu0 %v1661, 96
    %v1686 = vpop.permute.xlu0 %1685
    %1687 = vrot.lane.b32.xlu0 %v1662, 96
    %v1688 = vpop.permute.xlu0 %1687
    %1689 = vrot.lane.b32.xlu0 %v1663, 96
    %v1690 = vpop.permute.xlu0 %1689
    %1691 = vrot.lane.b32.xlu0 %v1664, 96
    %v1692 = vpop.permute.xlu0 %1691
    %1693 = vrot.lane.b32.xlu0 %v1665, 96
    %v1694 = vpop.permute.xlu0 %1693
    %1695 = vrot.lane.b32.xlu0 %v1666, 96
    %v1696 = vpop.permute.xlu0 %1695
    %1697 = vrot.lane.b32.xlu0 %v1667, 96
    %v1698 = vpop.permute.xlu0 %1697
    %1699 = vrot.lane.b32.xlu0 %v1668, 96
    %v1700 = vpop.permute.xlu0 %1699
    %v1709 = vmul.f32 %v1669, %v1686
    %v1710 = vmul.f32 %v1670, %v1688
    %v1711 = vmul.f32 %v1671, %v1690
    %v1712 = vmul.f32 %v1672, %v1692
    %v1713 = vmul.f32 %v1673, %v1694
    %v1714 = vmul.f32 %v1674, %v1696
    %v1715 = vmul.f32 %v1675, %v1698
    %v1716 = vmul.f32 %v1676, %v1700
    %1725 = vrot.lane.b32.xlu0 %v105, 32
    %v1726 = vpop.permute.xlu0 %1725
    %1727 = vrot.lane.b32.xlu0 %v106, 32
    %v1728 = vpop.permute.xlu0 %1727
    %1729 = vrot.lane.b32.xlu0 %v107, 32
    %v1730 = vpop.permute.xlu0 %1729
    %1731 = vrot.lane.b32.xlu0 %v108, 32
    %v1732 = vpop.permute.xlu0 %1731
    %1733 = vrot.lane.b32.xlu0 %v109, 32
    %v1734 = vpop.permute.xlu0 %1733
    %1735 = vrot.lane.b32.xlu0 %v110, 32
    %v1736 = vpop.permute.xlu0 %1735
    %1737 = vrot.lane.b32.xlu0 %v111, 32
    %v1738 = vpop.permute.xlu0 %1737
    %1739 = vrot.lane.b32.xlu0 %v112, 32
    %v1740 = vpop.permute.xlu0 %1739
    %v1749 = vmul.f32 %v1574, %v1726
    %v1750 = vmul.f32 %v1576, %v1728
    %v1751 = vmul.f32 %v1578, %v1730
    %v1752 = vmul.f32 %v1580, %v1732
    %v1753 = vmul.f32 %v1582, %v1734
    %v1754 = vmul.f32 %v1584, %v1736
    %v1755 = vmul.f32 %v1586, %v1738
    %v1756 = vmul.f32 %v1588, %v1740
    %v1757 = vadd.f32 %v1709, %v1749
    %v1758 = vadd.f32 %v1710, %v1750
    %v1759 = vadd.f32 %v1711, %v1751
    %v1760 = vadd.f32 %v1712, %v1752
    %v1761 = vadd.f32 %v1713, %v1753
    %v1762 = vadd.f32 %v1714, %v1754
    %v1763 = vadd.f32 %v1715, %v1755
    %v1764 = vadd.f32 %v1716, %v1756
    %1765 = vset.pattern.permute.xlu0 2
    %1766 = vperm.xlu0 %1765, %v524
    %v1767 = vpop.permute.xlu0 %1766
    %1768 = vset.pattern.permute.xlu0 2
    %1769 = vperm.xlu0 %1768, %v525
    %v1770 = vpop.permute.xlu0 %1769
    %1771 = vset.pattern.permute.xlu0 2
    %1772 = vperm.xlu0 %1771, %v526
    %v1773 = vpop.permute.xlu0 %1772
    %1774 = vset.pattern.permute.xlu0 2
    %1775 = vperm.xlu0 %1774, %v527
    %v1776 = vpop.permute.xlu0 %1775
    %1777 = vset.pattern.permute.xlu0 2
    %1778 = vperm.xlu0 %1777, %v528
    %v1779 = vpop.permute.xlu0 %1778
    %1780 = vset.pattern.permute.xlu0 2
    %1781 = vperm.xlu0 %1780, %v529
    %v1782 = vpop.permute.xlu0 %1781
    %1783 = vset.pattern.permute.xlu0 2
    %1784 = vperm.xlu0 %1783, %v530
    %v1785 = vpop.permute.xlu0 %1784
    %1786 = vset.pattern.permute.xlu0 2
    %1787 = vperm.xlu0 %1786, %v531
    %v1788 = vpop.permute.xlu0 %1787
    %vm1789 = vcmp.eq.s32.totalorder %v1767, 1
    %vm1790 = vcmp.eq.s32.totalorder %v1770, 1
    %vm1791 = vcmp.eq.s32.totalorder %v1773, 1
    %vm1792 = vcmp.eq.s32.totalorder %v1776, 1
    %vm1793 = vcmp.eq.s32.totalorder %v1779, 1
    %vm1794 = vcmp.eq.s32.totalorder %v1782, 1
    %vm1795 = vcmp.eq.s32.totalorder %v1785, 1
    %vm1796 = vcmp.eq.s32.totalorder %v1788, 1
    %v1797 = vsel %vm1789, %v1757, %v1726
    %v1798 = vsel %vm1790, %v1758, %v1728
    %v1799 = vsel %vm1791, %v1759, %v1730
    %v1800 = vsel %vm1792, %v1760, %v1732
    %v1801 = vsel %vm1793, %v1761, %v1734
    %v1802 = vsel %vm1794, %v1762, %v1736
    %v1803 = vsel %vm1795, %v1763, %v1738
    %v1804 = vsel %vm1796, %v1764, %v1740
    %1813 = vrot.lane.b32.xlu0 %v1797, 96
    %v1814 = vpop.permute.xlu0 %1813
    %1815 = vrot.lane.b32.xlu0 %v1798, 96
    %v1816 = vpop.permute.xlu0 %1815
    %1817 = vrot.lane.b32.xlu0 %v1799, 96
    %v1818 = vpop.permute.xlu0 %1817
    %1819 = vrot.lane.b32.xlu0 %v1800, 96
    %v1820 = vpop.permute.xlu0 %1819
    %1821 = vrot.lane.b32.xlu0 %v1801, 96
    %v1822 = vpop.permute.xlu0 %1821
    %1823 = vrot.lane.b32.xlu0 %v1802, 96
    %v1824 = vpop.permute.xlu0 %1823
    %1825 = vrot.lane.b32.xlu0 %v1803, 96
    %v1826 = vpop.permute.xlu0 %1825
    %1827 = vrot.lane.b32.xlu0 %v1804, 96
    %v1828 = vpop.permute.xlu0 %1827
    %1837 = vst.msk [vmem:[#allocation2] sm:$0xff] %vm172, %v1814
    %1838 = vst.msk [vmem:[#allocation2 + $0x8] sm:$0xff] %vm172, %v1816
    %1839 = vst.msk [vmem:[#allocation2 + $0x10] sm:$0xff] %vm172, %v1818
    %1840 = vst.msk [vmem:[#allocation2 + $0x18] sm:$0xff] %vm172, %v1820
    %1841 = vst.msk [vmem:[#allocation2 + $0x20] sm:$0xff] %vm172, %v1822
    %1842 = vst.msk [vmem:[#allocation2 + $0x28] sm:$0xff] %vm172, %v1824
    %1843 = vst.msk [vmem:[#allocation2 + $0x30] sm:$0xff] %vm172, %v1826
    %1844 = vst.msk [vmem:[#allocation2 + $0x38] sm:$0xff] %vm172, %v1828
    %1845 = vset.pattern.permute.xlu0 1
    %1846 = vperm.xlu0 %1845, %v104
    %v1847 = vpop.permute.xlu0 %1846
    %vm1848 = vcmp.eq.s32.totalorder %v82, %v1847
    %v1849 = vsel %vm1848, 1, 0
    %v1850 = vcvt.s32.f32 %v1849
    %v1851 = vpack.c.bf16 %v1850, %v1850
    %v1852 = vpack.c.bf16 %v1798, %v1797
    %v1853 = vpack.c.bf16 %v1800, %v1799
    %v1854 = vpack.c.bf16 %v1802, %v1801
    %v1855 = vpack.c.bf16 %v1804, %v1803
    %1860 = vrot.lane.b32.xlu0 %v1852, 96
    %v1861 = vpop.permute.xlu0 %1860
    %1862 = vrot.lane.b32.xlu0 %v1853, 96
    %v1863 = vpop.permute.xlu0 %1862
    %1864 = vrot.lane.b32.xlu0 %v1854, 96
    %v1865 = vpop.permute.xlu0 %1864
    %1866 = vrot.lane.b32.xlu0 %v1855, 96
    %v1867 = vpop.permute.xlu0 %1866
    %v1873 = vsel %vm124, %v1851, 0
    %1875 = vmatprep.subr.bf16.mxu0 0
    %1876 = vmatpush1.bf16.msra.mxu0 0
    %1877 = vmatprep.subr.bf16.mxu0 0
    %1878 = vmatpush1.bf16.msra.mxu0 0
    %1879 = vmatprep.subr.bf16.mxu0 0
    %1880 = vmatpush1.bf16.msra.mxu0 0
    %1881 = vmatprep.subr.bf16.mxu0 0
    %1882 = vmatpush1.bf16.msra.mxu0 0
    %1883 = vmatprep.subr.bf16.mxu0 0
    %1884 = vmatpush1.bf16.msra.mxu0 %v1867
    %1885 = vmatprep.subr.bf16.mxu0 0
    %1886 = vmatpush1.bf16.msra.mxu0 %v1865
    %1887 = vmatprep.subr.bf16.mxu0 0
    %1888 = vmatpush1.bf16.msra.mxu0 %v1863
    %1889 = vmatprep.subr.bf16.mxu0 0
    %1890 = vmatpush1.bf16.msra.mxu0 %v1861
    %1891 = vmatprep.subr.bf16.mxu0 0
    %1892 = vmatpush2.bf16.msra.mxu0 0
    %1893 = vmatprep.subr.bf16.mxu0 0
    %1894 = vmatpush2.bf16.msra.mxu0 0
    %1895 = vmatprep.subr.bf16.mxu0 0
    %1896 = vmatpush2.bf16.msra.mxu0 0
    %1897 = vmatprep.subr.bf16.mxu0 0
    %1898 = vmatpush2.bf16.msra.mxu0 0
    %1899 = vmatprep.subr.bf16.mxu0 0
    %1900 = vmatpush2.bf16.msra.mxu0 0
    %1901 = vmatprep.subr.bf16.mxu0 0
    %1902 = vmatpush2.bf16.msra.mxu0 0
    %1903 = vmatprep.subr.bf16.mxu0 0
    %1904 = vmatpush2.bf16.msra.mxu0 0
    %1905 = vmatprep.subr.bf16.mxu0 0
    %1906 = vmatpush2.bf16.msra.mxu0 0
    %1907 = vmatprep.mubr.bf16.mxu0 0
    %1908 = vmatmul.mubr.bf16.gmra.mxu0 %v1873
    %v1909 = vpop.f32.mrf.mxu0
    %v1910 = vadd.f32 0.0, %v1909
    %v1911 = vpop.f32.mrf.mxu0
    %v1912 = vpop.f32.mrf.mxu0
    %v1913 = vpop.f32.mrf.mxu0
    %1914 = vdwg.mxu0
    %v1915 = vld [vmem:[%s18] sm:$0x1]
    %v1917 = vlaneseq
    %v1918 = vshrl.u32 %v1917, 7
    %v1919 = vsub.s32 0, %v1918
    %v1920 = vrot.slane %v1915, %v1919
    %v1922 = vmul.f32 %v1910, %v1920
    %vm1923 = vcmask 257024
    %v1924 = vsel %vm1923, %v1922, 0.0
    %1925 = vadd.xlane.f32.xlu0 %v1924
    %v1926 = vpop.xlane.xlu0 %1925
    %v1927 = vld [vmem:[#allocation3] sm:$0x1]
    %v1929 = vlaneseq
    %v1930 = vshrl.u32 %v1929, 7
    %v1931 = vsub.s32 0, %v1930
    %v1932 = vrot.slane %v1927, %v1931
    %v1934 = vadd.f32 %v1926, %v1932
    %vm1935 = vcmp.gt.f32.partialorder %v103, 0.0
    %v1936 = vxor.u32 %v1934, 2147483648
    %v1937 = vmul.f32 %v1936, 1.442695
    %v1938 = vpow.pop %v1937
    %v1939 = vadd.f32 %v1938, 1.0
    %v1940 = vrcp.pop %v1939
    %v1941 = vmul.f32 1.0, %v1940
    %1943 = vrot.lane.b32.xlu0 %v1941, 2
    %v1944 = vpop.permute.xlu0 %1943
    %1947 = vrot.lane.b32.xlu0 %v1934, 2
    %v1948 = vpop.permute.xlu0 %1947
    %v1950 = vsel %vm1935, %v1944, %v1948
    %1952 = vrot.lane.b32.xlu0 %v103, 127
    %v1953 = vpop.permute.xlu0 %1952
    %v1955 = vmul.f32 %v1950, %v1953
    %1957 = vrot.lane.b32.xlu0 %v1955, 126
    %v1958 = vpop.permute.xlu0 %1957
    %s1960 = scalar_lea.vmem %s20, %s89
    %vm1961 = vcmask 3072
    %1962 = vst.msk [vmem:[%s1960] sm:$0xf] %vm1961, %v1958
  $region90: #{gkt_forward.1} parent=0 // loop_footer
    %s88 = sadd.s32 1, %s84
  $region91: #{gkt_forward.1} parent=0 // loop_footer_branch
    %83 = sbr.rel target = $region87
  $region92: #{gkt_forward.1} parent=0 // loop_exit
    _
  // Predicated region
  $region93: #{gkt_forward.1} parent=0 // pred_check
    _
  $region94: #{gkt_forward.1} parent=0 // pred_check_branch
    %1964 = sbr.rel (0) target = $region96
  $region95: #{gkt_forward.1} parent=0 // pred_region
    _
  $region96: #{gkt_forward.1} parent=0 // pred_fallthru
    _
  // Predicated region
  $region97: #{gkt_forward.1} parent=0 // pred_check
    _
  $region98: #{gkt_forward.1} parent=0 // pred_check_branch
    %1966 = sbr.rel (0) target = $region100
  $region99: #{gkt_forward.1} parent=0 // pred_region
    _
  $region100: #{gkt_forward.1} parent=0 // pred_fallthru
    _

</llo_original>
